<compile_context>
chip_gen: v6e
topology: v6e:2x2x1
jax: 0.10.0
libtpu: 0.0.40
codegen_flags: <defaults>
</compile_context>

<pallas_src>
import functools

import jax
import jax.numpy as jnp
from jax.experimental import pallas as pl
from jax.experimental.pallas import tpu as pltpu

EPS = 1e-5   # PyTorch InstanceNorm2d default eps
LANE = 128


# ------------------------------ Pallas kernel -------------------------------

def _conv_block_kernel(x_ref, w_ref, b_ref, g_ref, be_ref, o_ref,
                       y_sc, sum_sc, sq_sc, *,
                       ksize, block_rows, out_w, normalize, relu):
    # grid = (batch, pass, row_tile); pass 0 = conv+stats, pass 1 = normalize+store
    p = pl.program_id(1)
    t = pl.program_id(2)
    t_hw = block_rows * out_w
    c_kw = w_ref.shape[-2]      # K*Cin padded to a multiple of 128 (lane-dense)
    cout = w_ref.shape[-1]      # Cout  padded to a multiple of 128 (lane-dense)

    @pl.when(p == 0)
    def _conv_pass():
        if normalize:
            @pl.when(t == 0)
            def _init_stats():
                sum_sc[...] = jnp.zeros_like(sum_sc)
                sq_sc[...] = jnp.zeros_like(sq_sc)

        row0 = pl.multiple_of(t * block_rows, block_rows)
        # kw taps already folded into the channel axis -> only K matmuls per tile,
        # each with contraction c_kw (>= 128), sliced directly from the resident ref.
        acc = jnp.zeros((t_hw, cout), jnp.float32)
        for kh in range(ksize):
            lhs = x_ref[0, pl.ds(row0 + kh, block_rows), :, :].reshape(t_hw, c_kw)
            acc = acc + jnp.dot(lhs, w_ref[kh],
                                preferred_element_type=jnp.float32)
        y = acc + b_ref[...]                                   # (t_hw, cout) f32

        if normalize:
            # Stats from the f32 accumulator (before the bf16 resident store).
            sum_sc[...] += jnp.sum(y, axis=0, keepdims=True)
            sq_sc[...] += jnp.sum(y * y, axis=0, keepdims=True)

        off = pl.multiple_of(t * t_hw, t_hw)
        y_sc[pl.ds(off, t_hw), :] = y.astype(y_sc.dtype)       # resident conv output

    @pl.when(p == 1)
    def _norm_pass():
        if normalize:
            @pl.when(t == 0)
            def _finalize_stats():
                # One-pass variance; sums are f32.  TODO(synk): switch to shifted /
                # Welford sums if tolerances tighten.
                n = jnp.float32(y_sc.shape[0])
                mean = sum_sc[...] / n
                var = sq_sc[...] / n - mean * mean
                inv = jax.lax.rsqrt(jnp.maximum(var, 0.0) + EPS)
                scale = g_ref[...] * inv
                shift = be_ref[...] - mean * scale
                sum_sc[...] = scale                            # reuse stats scratch
                sq_sc[...] = shift

        off = pl.multiple_of(t * t_hw, t_hw)
        y = y_sc[pl.ds(off, t_hw), :].astype(jnp.float32)
        if normalize:
            y = y * sum_sc[...] + sq_sc[...]
        if relu:
            y = jnp.maximum(y, 0.0)
        o_ref[0] = y                                           # lane-dense store


# --------------------------------- Wrapper -----------------------------------

def _round_up(x, m):
    return (x + m - 1) // m * m


def _default_block_rows(h, w, target_pixels=8192):
    # Largest divisor of H whose tile (rows*W) is <= target and sublane-aligned.
    for rows in range(h, 0, -1):
        if h % rows:
            continue
        hw = rows * w
        if hw <= target_pixels and (hw % 8 == 0 or rows == h):
            return rows
    return h


def conv_block(x, weight, bias, gamma, beta, *, kernel_size=3, stride=1,
               upsample=False, normalize=True, relu=True, block_rows=None,
               target_pixels=8192):
    """ConvBlock forward. x: (B, C_in, H, W) f32 -> (B, C_out, H, W) f32."""
    assert stride == 1, "TODO(synk): stride != 1 not implemented"
    assert kernel_size % 2 == 1

    if upsample:  # nearest-neighbor 2x (F.interpolate default), cheap XLA glue
        x = jnp.repeat(jnp.repeat(x, 2, axis=2), 2, axis=3)

    B, Cin, H, W = x.shape
    Cout = weight.shape[0]
    K = kernel_size
    pad = K // 2
    Hp = H + 2 * pad
    HW = H * W

    Ckw = K * Cin
    Ckw_p = _round_up(Ckw, LANE)      # lane-dense contraction dim
    Cout_p = _round_up(Cout, LANE)    # lane-dense output channel dim

    # Layout glue: NCHW -> NHWC, reflect pad, fold kw taps into the channel axis,
    # zero-pad channels to 128 multiples, bf16 MXU operands.
    x_nhwc = jnp.transpose(x, (0, 2, 3, 1)).astype(jnp.float32)
    x_pad = jnp.pad(x_nhwc, ((0, 0), (pad, pad), (pad, pad), (0, 0)), mode="reflect")
    # x_kw[b, h, w, kw*Cin + c] = x_pad[b, h, w + kw, c]   -> shape (B, Hp, W, K*Cin)
    x_kw = jnp.concatenate([x_pad[:, :, kw:kw + W, :] for kw in range(K)], axis=-1)
    x_kw = jnp.pad(x_kw, ((0, 0), (0, 0), (0, 0), (0, Ckw_p - Ckw))).astype(jnp.bfloat16)

    # weight (Cout, Cin, K, K) -> w2[kh, kw*Cin + c, cout], channel-padded, bf16.
    w2 = jnp.transpose(weight, (2, 3, 1, 0)).reshape(K, Ckw, Cout)
    w2 = jnp.pad(w2, ((0, 0), (0, Ckw_p - Ckw), (0, Cout_p - Cout))).astype(jnp.bfloat16)

    b2 = jnp.pad(bias, (0, Cout_p - Cout)).reshape(1, Cout_p).astype(jnp.float32)
    g2 = jnp.pad(gamma, (0, Cout_p - Cout)).reshape(1, Cout_p).astype(jnp.float32)
    be2 = jnp.pad(beta, (0, Cout_p - Cout)).reshape(1, Cout_p).astype(jnp.float32)

    t_rows = _default_block_rows(H, W, target_pixels) if block_rows is None else block_rows
    assert H % t_rows == 0
    assert t_rows == H or (t_rows * W) % 8 == 0
    n_tiles = H // t_rows
    t_hw = t_rows * W

    kernel = functools.partial(
        _conv_block_kernel, ksize=K, block_rows=t_rows, out_w=W,
        normalize=normalize, relu=relu)

    # VMEM budget (inputs double-buffered; y_sc resident in bf16), clamped to the
    # physical VMEM of the device (v7x has 64 MiB per TensorCore).
    x_blk = Hp * W * Ckw_p * 2
    w_blk = K * Ckw_p * Cout_p * 2
    vec_blk = 3 * Cout_p * 4
    out_blk = t_hw * Cout_p * 4
    scratch = HW * Cout_p * 2 + 2 * 8 * Cout_p * 4
    vmem_est = 2 * (x_blk + w_blk + vec_blk + out_blk) + scratch
    try:
        phys_vmem = int(pltpu.get_tpu_info().vmem_capacity_bytes)
    except Exception:  # interpret mode / older API: assume the smallest (v7x) VMEM
        phys_vmem = 64 * 1024 * 1024
    vmem_limit = int(min(max(32 * 1024 * 1024, int(1.3 * vmem_est)),
                         int(0.9 * phys_vmem)))

    cost = pl.CostEstimate(
        flops=int(2 * B * HW * K * Ckw_p * Cout_p + 10 * B * HW * Cout_p),
        transcendentals=int(B * Cout_p),
        bytes_accessed=int(B * Hp * W * Ckw_p * 2 + K * Ckw_p * Cout_p * 2
                           + 3 * Cout_p * 4 + B * HW * Cout_p * 4),
    )

    out_flat = pl.pallas_call(
        kernel,
        out_shape=jax.ShapeDtypeStruct((B, HW, Cout_p), jnp.float32),
        grid_spec=pltpu.PrefetchScalarGridSpec(
            num_scalar_prefetch=0,
            grid=(B, 2, n_tiles),
            in_specs=[
                # kw-folded padded image: resident per batch element.
                pl.BlockSpec((1, Hp, W, Ckw_p), lambda b, p, t: (b, 0, 0, 0)),
                pl.BlockSpec((K, Ckw_p, Cout_p), lambda b, p, t: (0, 0, 0)),
                pl.BlockSpec((1, Cout_p), lambda b, p, t: (0, 0)),
                pl.BlockSpec((1, Cout_p), lambda b, p, t: (0, 0)),
                pl.BlockSpec((1, Cout_p), lambda b, p, t: (0, 0)),
            ],
            # Pass 0 parks on tile 0 (never written); pass 1 streams tile t.
            out_specs=pl.BlockSpec((1, t_hw, Cout_p), lambda b, p, t: (b, p * t, 0)),
            scratch_shapes=[
                pltpu.VMEM((HW, Cout_p), jnp.bfloat16),  # resident conv output (bf16)
                pltpu.VMEM((1, Cout_p), jnp.float32),    # sum   -> scale
                pltpu.VMEM((1, Cout_p), jnp.float32),    # sumsq -> shift
            ],
        ),
        compiler_params=pltpu.CompilerParams(
            dimension_semantics=("parallel", "arbitrary", "arbitrary"),
            vmem_limit_bytes=vmem_limit,
        ),
        cost_estimate=cost,
    )(x_kw, w2, b2, g2, be2)

    out = out_flat[:, :, :Cout].reshape(B, H, W, Cout)
    return jnp.transpose(out, (0, 3, 1, 2))


# ---------------------------- pure-JAX reference ------------------------------

def conv_block_ref(x, weight, bias, gamma, beta, *, kernel_size=3,
                   upsample=False, normalize=True, relu=True):
    if upsample:
        x = jnp.repeat(jnp.repeat(x, 2, axis=2), 2, axis=3)
    pad = kernel_size // 2
    xp = jnp.pad(x, ((0, 0), (0, 0), (pad, pad), (pad, pad)), mode="reflect")
    y = jax.lax.conv_general_dilated(
        xp, weight, window_strides=(1, 1), padding="VALID",
        dimension_numbers=("NCHW", "OIHW", "NCHW"))
    y = y + bias[None, :, None, None]
    if normalize:
        m = y.mean(axis=(2, 3), keepdims=True)
        v = ((y - m) ** 2).mean(axis=(2, 3), keepdims=True)
        y = (y - m) / jnp.sqrt(v + EPS) * gamma[None, :, None, None] \
            + beta[None, :, None, None]
    if relu:
        y = jnp.maximum(y, 0.0)
    return y


# ----------------------------------- main -------------------------------------

if __name__ == "__main__":
    # Test 1: multi-tile path (block_rows=8 -> 2 row tiles), B=2.
    B, C_in, C_out, H, W = 2, 4, 4, 16, 16
    key = jax.random.PRNGKey(0)
    kx, kw, kb, kg, kbe = jax.random.split(key, 5)

    x = jax.random.normal(kx, (B, C_in, H, W), dtype=jnp.float32)
    weight = 0.1 * jax.random.normal(kw, (C_out, C_in, 3, 3), dtype=jnp.float32)
    bias = 0.1 * jax.random.normal(kb, (C_out,), dtype=jnp.float32)
    gamma = 1.0 + 0.1 * jax.random.normal(kg, (C_out,), dtype=jnp.float32)
    beta = 0.1 * jax.random.normal(kbe, (C_out,), dtype=jnp.float32)

    fn = jax.jit(functools.partial(conv_block, kernel_size=3, block_rows=8))
    out = jax.block_until_ready(fn(x, weight, bias, gamma, beta))
    ref = conv_block_ref(x, weight, bias, gamma, beta, kernel_size=3)
    assert out.shape == (B, C_out, H, W)
    # bf16 MXU operands (f32 accumulation): allow ~1e-2-level error vs f32 reference.
    assert jnp.allclose(out, ref, rtol=3e-2, atol=3e-2), (
        f"mismatch vs reference, max abs err={float(jnp.max(jnp.abs(out - ref)))}")

    # Test 2: upsample path, Cin=3 (first-layer style), single tile, B=1.
    B2, Ci2, Co2, H2, W2 = 1, 3, 8, 8, 8
    k2 = jax.random.split(jax.random.PRNGKey(1), 5)
    x2 = jax.random.normal(k2[0], (B2, Ci2, H2, W2), dtype=jnp.float32)
    w2_ = 0.1 * jax.random.normal(k2[1], (Co2, Ci2, 3, 3), dtype=jnp.float32)
    b2_ = 0.1 * jax.random.normal(k2[2], (Co2,), dtype=jnp.float32)
    g2_ = 1.0 + 0.1 * jax.random.normal(k2[3], (Co2,), dtype=jnp.float32)
    be2_ = 0.1 * jax.random.normal(k2[4], (Co2,), dtype=jnp.float32)

    fn2 = jax.jit(functools.partial(conv_block, kernel_size=3, upsample=True))
    out2 = jax.block_until_ready(fn2(x2, w2_, b2_, g2_, be2_))
    ref2 = conv_block_ref(x2, w2_, b2_, g2_, be2_, kernel_size=3, upsample=True)
    assert out2.shape == ref2.shape
    assert jnp.allclose(out2, ref2, rtol=3e-2, atol=3e-2), (
        f"mismatch (upsample) max abs err={float(jnp.max(jnp.abs(out2 - ref2)))}")

    print("KERNEL_OK")
</pallas_src>

<mosaic_0001>
module attributes {stable_mosaic.version = 11 : i64} {
  func.func @_conv_block_kernel(%arg0: i32, %arg1: i32, %arg2: i32, %arg3: memref<1x18x16x128xbf16, #tpu.memory_space<vmem>>, %arg4: memref<3x128x128xbf16, #tpu.memory_space<vmem>>, %arg5: memref<1x128xf32, #tpu.memory_space<vmem>>, %arg6: memref<1x128xf32, #tpu.memory_space<vmem>>, %arg7: memref<1x128xf32, #tpu.memory_space<vmem>>, %arg8: memref<1x128x128xf32, #tpu.memory_space<vmem>>, %arg9: memref<256x128xbf16, #tpu.memory_space<vmem>>, %arg10: memref<1x128xf32, #tpu.memory_space<vmem>>, %arg11: memref<1x128xf32, #tpu.memory_space<vmem>>) attributes {dimension_semantics = [#tpu.dimension_semantics<parallel>, #tpu.dimension_semantics<arbitrary>, #tpu.dimension_semantics<arbitrary>], iteration_bounds = array<i64: 2, 2, 2>, scalar_prefetch = 0 : i64, scratch_operands = 3 : i64, tpu.core_type = #tpu.core_type<tc>, window_params = [{transform_indices = @transform_0, window_bounds = array<i64: 1, 18, 16, 128>}, {pipeline_mode = #tpu.pipeline_mode<synchronous>, transform_indices = @transform_1, window_bounds = array<i64: 3, 128, 128>}, {pipeline_mode = #tpu.pipeline_mode<synchronous>, transform_indices = @transform_2, window_bounds = array<i64: 1, 128>}, {pipeline_mode = #tpu.pipeline_mode<synchronous>, transform_indices = @transform_3, window_bounds = array<i64: 1, 128>}, {pipeline_mode = #tpu.pipeline_mode<synchronous>, transform_indices = @transform_4, window_bounds = array<i64: 1, 128>}, {transform_indices = @transform_5, window_bounds = array<i64: 1, 128, 128>}]} {
    %c0_i32 = arith.constant 0 : i32
    %0 = arith.cmpi eq, %arg1, %c0_i32 : i32
    %1 = arith.extui %0 : i1 to i32
    %c0_i32_0 = arith.constant 0 : i32
    %2 = arith.cmpi ne, %1, %c0_i32_0 : i32
    scf.if %2 {
      %c0_i32_2 = arith.constant 0 : i32
      %6 = arith.cmpi eq, %arg2, %c0_i32_2 : i32
      %7 = arith.extui %6 : i1 to i32
      %c0_i32_3 = arith.constant 0 : i32
      %8 = arith.cmpi ne, %7, %c0_i32_3 : i32
      scf.if %8 {
        %cst_37 = arith.constant 0.000000e+00 : f32
        %58 = vector.broadcast %cst_37 : f32 to vector<1x128xf32>
        %c0_38 = arith.constant 0 : index
        %c0_39 = arith.constant 0 : index
        %59 = vector.load %arg10[%c0_38, %c0_39] : memref<1x128xf32, #tpu.memory_space<vmem>>, vector<1x128xf32>
        tpu.vector_store %arg10[%c0_38, %c0_39], %58 {strides = array<i32>} : memref<1x128xf32, #tpu.memory_space<vmem>>, vector<1x128xf32>,
        %cst_40 = arith.constant 0.000000e+00 : f32
        %60 = vector.broadcast %cst_40 : f32 to vector<1x128xf32>
        %c0_41 = arith.constant 0 : index
        %c0_42 = arith.constant 0 : index
        %61 = vector.load %arg11[%c0_41, %c0_42] : memref<1x128xf32, #tpu.memory_space<vmem>>, vector<1x128xf32>
        tpu.vector_store %arg11[%c0_41, %c0_42], %60 {strides = array<i32>} : memref<1x128xf32, #tpu.memory_space<vmem>>, vector<1x128xf32>,
      } else {
      }
      %c8_i32 = arith.constant 8 : i32
      %9 = arith.muli %arg2, %c8_i32 : i32
      %10 = tpu.assume_multiple %9, 8 : i32
      %cst = arith.constant 0.000000e+00 : f32
      %11 = vector.broadcast %cst : f32 to vector<128x128xf32>
      %c0_i32_4 = arith.constant 0 : i32
      %12 = arith.addi %10, %c0_i32_4 : i32
      %c0 = arith.constant 0 : index
      %13 = arith.index_cast %12 : i32 to index
      %c0_5 = arith.constant 0 : index
      %c0_6 = arith.constant 0 : index
      %14 = vector.load %arg3[%c0, %13, %c0_5, %c0_6] : memref<1x18x16x128xbf16, #tpu.memory_space<vmem>>, vector<1x8x16x128xbf16>
      %15 = vector.shape_cast %14 : vector<1x8x16x128xbf16> to vector<8x16x128xbf16>
      %16 = vector.shape_cast %15 : vector<8x16x128xbf16> to vector<128x128xbf16>
      %c0_7 = arith.constant 0 : index
      %c0_8 = arith.constant 0 : index
      %c0_9 = arith.constant 0 : index
      %17 = vector.load %arg4[%c0_7, %c0_8, %c0_9] : memref<3x128x128xbf16, #tpu.memory_space<vmem>>, vector<1x128x128xbf16>
      %18 = vector.shape_cast %17 : vector<1x128x128xbf16> to vector<128x128xbf16>
      %cst_10 = arith.constant dense<0.000000e+00> : vector<128x128xf32>
      %19 = tpu.matmul %16, %18, %cst_10 {dimension_numbers = #tpu.dot_dimension_numbers<[1], [0], [0], [1], [0, 0, 1, 1], [], []>} : vector<128x128xbf16>, vector<128x128xbf16>, vector<128x128xf32> -> vector<128x128xf32>
      %20 = arith.addf %11, %19 : vector<128x128xf32>
      %c1_i32_11 = arith.constant 1 : i32
      %21 = arith.addi %10, %c1_i32_11 : i32
      %c0_12 = arith.constant 0 : index
      %22 = arith.index_cast %21 : i32 to index
      %c0_13 = arith.constant 0 : index
      %c0_14 = arith.constant 0 : index
      %23 = vector.load %arg3[%c0_12, %22, %c0_13, %c0_14] : memref<1x18x16x128xbf16, #tpu.memory_space<vmem>>, vector<1x8x16x128xbf16>
      %24 = vector.shape_cast %23 : vector<1x8x16x128xbf16> to vector<8x16x128xbf16>
      %25 = vector.shape_cast %24 : vector<8x16x128xbf16> to vector<128x128xbf16>
      %c1 = arith.constant 1 : index
      %c0_15 = arith.constant 0 : index
      %c0_16 = arith.constant 0 : index
      %26 = vector.load %arg4[%c1, %c0_15, %c0_16] : memref<3x128x128xbf16, #tpu.memory_space<vmem>>, vector<1x128x128xbf16>
      %27 = vector.shape_cast %26 : vector<1x128x128xbf16> to vector<128x128xbf16>
      %cst_17 = arith.constant dense<0.000000e+00> : vector<128x128xf32>
      %28 = tpu.matmul %25, %27, %cst_17 {dimension_numbers = #tpu.dot_dimension_numbers<[1], [0], [0], [1], [0, 0, 1, 1], [], []>} : vector<128x128xbf16>, vector<128x128xbf16>, vector<128x128xf32> -> vector<128x128xf32>
      %29 = arith.addf %20, %28 : vector<128x128xf32>
      %c2_i32 = arith.constant 2 : i32
      %30 = arith.addi %10, %c2_i32 : i32
      %c0_18 = arith.constant 0 : index
      %31 = arith.index_cast %30 : i32 to index
      %c0_19 = arith.constant 0 : index
      %c0_20 = arith.constant 0 : index
      %32 = vector.load %arg3[%c0_18, %31, %c0_19, %c0_20] : memref<1x18x16x128xbf16, #tpu.memory_space<vmem>>, vector<1x8x16x128xbf16>
      %33 = vector.shape_cast %32 : vector<1x8x16x128xbf16> to vector<8x16x128xbf16>
      %34 = vector.shape_cast %33 : vector<8x16x128xbf16> to vector<128x128xbf16>
      %c2 = arith.constant 2 : index
      %c0_21 = arith.constant 0 : index
      %c0_22 = arith.constant 0 : index
      %35 = vector.load %arg4[%c2, %c0_21, %c0_22] : memref<3x128x128xbf16, #tpu.memory_space<vmem>>, vector<1x128x128xbf16>
      %36 = vector.shape_cast %35 : vector<1x128x128xbf16> to vector<128x128xbf16>
      %cst_23 = arith.constant dense<0.000000e+00> : vector<128x128xf32>
      %37 = tpu.matmul %34, %36, %cst_23 {dimension_numbers = #tpu.dot_dimension_numbers<[1], [0], [0], [1], [0, 0, 1, 1], [], []>} : vector<128x128xbf16>, vector<128x128xbf16>, vector<128x128xf32> -> vector<128x128xf32>
      %38 = arith.addf %29, %37 : vector<128x128xf32>
      %c0_24 = arith.constant 0 : index
      %c0_25 = arith.constant 0 : index
      %39 = vector.load %arg5[%c0_24, %c0_25] : memref<1x128xf32, #tpu.memory_space<vmem>>, vector<1x128xf32>
      %40 = vector.broadcast %39 : vector<1x128xf32> to vector<128x128xf32>
      %41 = arith.addf %38, %40 : vector<128x128xf32>
      %c0_26 = arith.constant 0 : index
      %c0_27 = arith.constant 0 : index
      %42 = vector.load %arg10[%c0_26, %c0_27] : memref<1x128xf32, #tpu.memory_space<vmem>>, vector<1x128xf32>
      %cst_28 = arith.constant dense<0.000000e+00> : vector<128xf32>
      %43 = vector.multi_reduction <add>, %41, %cst_28 [0] : vector<128x128xf32> to vector<128xf32>
      %44 = vector.shape_cast %43 : vector<128xf32> to vector<1x128xf32>
      %45 = arith.addf %42, %44 : vector<1x128xf32>
      %c0_29 = arith.constant 0 : index
      %c0_30 = arith.constant 0 : index
      %46 = vector.load %arg10[%c0_29, %c0_30] : memref<1x128xf32, #tpu.memory_space<vmem>>, vector<1x128xf32>
      tpu.vector_store %arg10[%c0_29, %c0_30], %45 {strides = array<i32>} : memref<1x128xf32, #tpu.memory_space<vmem>>, vector<1x128xf32>,
      %c0_31 = arith.constant 0 : index
      %c0_32 = arith.constant 0 : index
      %47 = vector.load %arg11[%c0_31, %c0_32] : memref<1x128xf32, #tpu.memory_space<vmem>>, vector<1x128xf32>
      %48 = arith.mulf %41, %41 : vector<128x128xf32>
      %cst_33 = arith.constant dense<0.000000e+00> : vector<128xf32>
      %49 = vector.multi_reduction <add>, %48, %cst_33 [0] : vector<128x128xf32> to vector<128xf32>
      %50 = vector.shape_cast %49 : vector<128xf32> to vector<1x128xf32>
      %51 = arith.addf %47, %50 : vector<1x128xf32>
      %c0_34 = arith.constant 0 : index
      %c0_35 = arith.constant 0 : index
      %52 = vector.load %arg11[%c0_34, %c0_35] : memref<1x128xf32, #tpu.memory_space<vmem>>, vector<1x128xf32>
      tpu.vector_store %arg11[%c0_34, %c0_35], %51 {strides = array<i32>} : memref<1x128xf32, #tpu.memory_space<vmem>>, vector<1x128xf32>,
      %c128_i32 = arith.constant 128 : i32
      %53 = arith.muli %arg2, %c128_i32 : i32
      %54 = tpu.assume_multiple %53, 128 : i32
      %55 = arith.truncf %41 : vector<128x128xf32> to vector<128x128xbf16>
      %56 = arith.index_cast %54 : i32 to index
      %c0_36 = arith.constant 0 : index
      %57 = vector.load %arg9[%56, %c0_36] : memref<256x128xbf16, #tpu.memory_space<vmem>>, vector<128x128xbf16>
      tpu.vector_store %arg9[%56, %c0_36], %55 {strides = array<i32>} : memref<256x128xbf16, #tpu.memory_space<vmem>>, vector<128x128xbf16>,
    } else {
    }
    %c1_i32 = arith.constant 1 : i32
    %3 = arith.cmpi eq, %arg1, %c1_i32 : i32
    %4 = arith.extui %3 : i1 to i32
    %c0_i32_1 = arith.constant 0 : i32
    %5 = arith.cmpi ne, %4, %c0_i32_1 : i32
    scf.if %5 {
      %c0_i32_2 = arith.constant 0 : i32
      %6 = arith.cmpi eq, %arg2, %c0_i32_2 : i32
      %7 = arith.extui %6 : i1 to i32
      %c0_i32_3 = arith.constant 0 : i32
      %8 = arith.cmpi ne, %7, %c0_i32_3 : i32
      scf.if %8 {
        %c0_11 = arith.constant 0 : index
        %c0_12 = arith.constant 0 : index
        %25 = vector.load %arg10[%c0_11, %c0_12] : memref<1x128xf32, #tpu.memory_space<vmem>>, vector<1x128xf32>
        %cst_13 = arith.constant 2.560000e+02 : f32
        %26 = vector.broadcast %cst_13 : f32 to vector<1x128xf32>
        %27 = arith.divf %25, %26 : vector<1x128xf32>
        %c0_14 = arith.constant 0 : index
        %c0_15 = arith.constant 0 : index
        %28 = vector.load %arg11[%c0_14, %c0_15] : memref<1x128xf32, #tpu.memory_space<vmem>>, vector<1x128xf32>
        %cst_16 = arith.constant 2.560000e+02 : f32
        %29 = vector.broadcast %cst_16 : f32 to vector<1x128xf32>
        %30 = arith.divf %28, %29 : vector<1x128xf32>
        %31 = arith.mulf %27, %27 : vector<1x128xf32>
        %32 = arith.subf %30, %31 : vector<1x128xf32>
        %cst_17 = arith.constant 0.000000e+00 : f32
        %33 = vector.broadcast %cst_17 : f32 to vector<1x128xf32>
        %34 = arith.maximumf %32, %33 : vector<1x128xf32>
        %cst_18 = arith.constant 9.99999974E-6 : f32
        %35 = vector.broadcast %cst_18 : f32 to vector<1x128xf32>
        %36 = arith.addf %34, %35 : vector<1x128xf32>
        %37 = math.rsqrt %36 : vector<1x128xf32>
        %c0_19 = arith.constant 0 : index
        %c0_20 = arith.constant 0 : index
        %38 = vector.load %arg6[%c0_19, %c0_20] : memref<1x128xf32, #tpu.memory_space<vmem>>, vector<1x128xf32>
        %39 = arith.mulf %38, %37 : vector<1x128xf32>
        %c0_21 = arith.constant 0 : index
        %c0_22 = arith.constant 0 : index
        %40 = vector.load %arg7[%c0_21, %c0_22] : memref<1x128xf32, #tpu.memory_space<vmem>>, vector<1x128xf32>
        %41 = arith.mulf %27, %39 : vector<1x128xf32>
        %42 = arith.subf %40, %41 : vector<1x128xf32>
        %c0_23 = arith.constant 0 : index
        %c0_24 = arith.constant 0 : index
        %43 = vector.load %arg10[%c0_23, %c0_24] : memref<1x128xf32, #tpu.memory_space<vmem>>, vector<1x128xf32>
        tpu.vector_store %arg10[%c0_23, %c0_24], %39 {strides = array<i32>} : memref<1x128xf32, #tpu.memory_space<vmem>>, vector<1x128xf32>,
        %c0_25 = arith.constant 0 : index
        %c0_26 = arith.constant 0 : index
        %44 = vector.load %arg11[%c0_25, %c0_26] : memref<1x128xf32, #tpu.memory_space<vmem>>, vector<1x128xf32>
        tpu.vector_store %arg11[%c0_25, %c0_26], %42 {strides = array<i32>} : memref<1x128xf32, #tpu.memory_space<vmem>>, vector<1x128xf32>,
      } else {
      }
      %c128_i32 = arith.constant 128 : i32
      %9 = arith.muli %arg2, %c128_i32 : i32
      %10 = tpu.assume_multiple %9, 128 : i32
      %11 = arith.index_cast %10 : i32 to index
      %c0 = arith.constant 0 : index
      %12 = vector.load %arg9[%11, %c0] : memref<256x128xbf16, #tpu.memory_space<vmem>>, vector<128x128xbf16>
      %13 = arith.extf %12 : vector<128x128xbf16> to vector<128x128xf32>
      %c0_4 = arith.constant 0 : index
      %c0_5 = arith.constant 0 : index
      %14 = vector.load %arg10[%c0_4, %c0_5] : memref<1x128xf32, #tpu.memory_space<vmem>>, vector<1x128xf32>
      %15 = vector.broadcast %14 : vector<1x128xf32> to vector<128x128xf32>
      %16 = arith.mulf %13, %15 : vector<128x128xf32>
      %c0_6 = arith.constant 0 : index
      %c0_7 = arith.constant 0 : index
      %17 = vector.load %arg11[%c0_6, %c0_7] : memref<1x128xf32, #tpu.memory_space<vmem>>, vector<1x128xf32>
      %18 = vector.broadcast %17 : vector<1x128xf32> to vector<128x128xf32>
      %19 = arith.addf %16, %18 : vector<128x128xf32>
      %cst = arith.constant 0.000000e+00 : f32
      %20 = vector.broadcast %cst : f32 to vector<128x128xf32>
      %21 = arith.maximumf %19, %20 : vector<128x128xf32>
      %c0_8 = arith.constant 0 : index
      %c0_9 = arith.constant 0 : index
      %c0_10 = arith.constant 0 : index
      %22 = vector.load %arg8[%c0_8, %c0_9, %c0_10] : memref<1x128x128xf32, #tpu.memory_space<vmem>>, vector<1x128x128xf32>
      %23 = vector.shape_cast %22 : vector<1x128x128xf32> to vector<128x128xf32>
      %24 = vector.shape_cast %21 : vector<128x128xf32> to vector<1x128x128xf32>
      tpu.vector_store %arg8[%c0_8, %c0_9, %c0_10], %24 {strides = array<i32>} : memref<1x128x128xf32, #tpu.memory_space<vmem>>, vector<1x128x128xf32>,
    } else {
    }
    return
  }
  func.func @transform_0(%arg0: i32, %arg1: i32, %arg2: i32) -> (i32, i32, i32, i32) {
    %c0_i32 = arith.constant 0 : i32
    %c0_i32_0 = arith.constant 0 : i32
    %c0_i32_1 = arith.constant 0 : i32
    %c0_i32_2 = arith.constant 0 : i32
    return %arg0, %c0_i32, %c0_i32_0, %c0_i32_1 : i32, i32, i32, i32
  }
  func.func @transform_1(%arg0: i32, %arg1: i32, %arg2: i32) -> (i32, i32, i32) {
    %c0_i32 = arith.constant 0 : i32
    %c0_i32_0 = arith.constant 0 : i32
    %c0_i32_1 = arith.constant 0 : i32
    %c0_i32_2 = arith.constant 0 : i32
    return %c0_i32, %c0_i32_0, %c0_i32_1 : i32, i32, i32
  }
  func.func @transform_2(%arg0: i32, %arg1: i32, %arg2: i32) -> (i32, i32) {
    %c0_i32 = arith.constant 0 : i32
    %c0_i32_0 = arith.constant 0 : i32
    %c0_i32_1 = arith.constant 0 : i32
    return %c0_i32, %c0_i32_0 : i32, i32
  }
  func.func @transform_3(%arg0: i32, %arg1: i32, %arg2: i32) -> (i32, i32) {
    %c0_i32 = arith.constant 0 : i32
    %c0_i32_0 = arith.constant 0 : i32
    %c0_i32_1 = arith.constant 0 : i32
    return %c0_i32, %c0_i32_0 : i32, i32
  }
  func.func @transform_4(%arg0: i32, %arg1: i32, %arg2: i32) -> (i32, i32) {
    %c0_i32 = arith.constant 0 : i32
    %c0_i32_0 = arith.constant 0 : i32
    %c0_i32_1 = arith.constant 0 : i32
    return %c0_i32, %c0_i32_0 : i32, i32
  }
  func.func @transform_5(%arg0: i32, %arg1: i32, %arg2: i32) -> (i32, i32, i32) {
    %0 = arith.muli %arg1, %arg2 : i32
    %c0_i32 = arith.constant 0 : i32
    %c0_i32_0 = arith.constant 0 : i32
    return %arg0, %0, %c0_i32 : i32, i32, i32
  }
}

</mosaic_0001>

<llo_original>
// kernel: conv_block.1
$region0: #{conv_block.1}
  #allocation0 [shape = 'u32[]', space=smem, size = 0x4, offset = 0x4, fixed_abs, tag = 'smem constant byte address 0x4 - core index']
  #allocation1 [shape = 'u32[144,128]{1,0:T(1,128)}', space=vmem, size = 0x12000, scoped, tag = 'internal scratch']
  #allocation2 [shape = 'bf16[256,128]{1,0:T(8,128)(2,1)}', space=vmem, size = 0x10000, scoped, tag = 'scratch operand']
  #allocation3 [shape = 'f32[1,128]{1,0:T(1,128)}', space=vmem, size = 0x200, scoped, tag = 'scratch operand']
  #allocation4 [shape = 'f32[1,128]{1,0:T(1,128)}', space=vmem, size = 0x200, scoped, tag = 'scratch operand']
  %s0 = inlined_call_operand.vmem [shape: bf16[2,18,16,128], index: 0, kind: input, shape index: {}]
  %s1 = inlined_call_operand.vmem [shape: bf16[3,128,128], index: 1, kind: input, shape index: {}]
  %s2 = inlined_call_operand.vmem [shape: f32[1,128], index: 2, kind: input, shape index: {}]
  %s3 = inlined_call_operand.vmem [shape: f32[1,128], index: 3, kind: input, shape index: {}]
  %s4 = inlined_call_operand.vmem [shape: f32[1,128], index: 4, kind: input, shape index: {}]
  %s5 = inlined_call_operand.vmem [shape: f32[2,256,128], index: 5, kind: output, shape index: {}]
  %s6 = sld [smem:[#allocation0]]
  $region69: #{conv_block.1} parent=0
    _
  %s8 = ssub.s32 1, %s6
  %s9 = scalar_select 0, %s8, %s6
  loop: start=0, step=1, limit=10
  $region2: #{conv_block.1} parent=0 // loop_pre_header
    _
  $region3: #{conv_block.1} parent=0 // loop_header
    %s11 = sphi 0, %s15
    %p12 = scmp.ge.s32.totalorder %s11, 10
    %s18 = sphi 0, %s37
    %s19 = sphi 0, %s33
    %s20 = sphi 0, %s29
    %s21 = sphi 0, %s18
    %s22 = sphi 0, %s19
    %s23 = sphi 0, %s20
    %s24 = sphi 0, %s21
    %s25 = sphi 0, %s22
    %s26 = sphi 0, %s23
    %s40 = sphi 0, %s42
    %s43 = sphi 0, %s40
    %s44 = sphi 0, %s43
    %s60 = sphi 0, %s44
    %s64 = sphi 0, %s64
    %s66 = sphi 0, %s64
    %s67 = sphi 0, %s66
    %s81 = sphi 0, %s67
    %s85 = sphi 0, %s85
    %s87 = sphi 0, %s85
    %s88 = sphi 0, %s87
    %s102 = sphi 0, %s88
    %s106 = sphi 0, %s106
    %s108 = sphi 0, %s106
    %s109 = sphi 0, %s108
    %s123 = sphi 0, %s109
    %s127 = sphi 0, %s127
    %s129 = sphi 0, %s127
    %s130 = sphi 0, %s129
    %s144 = sphi 0, %s130
    %s154 = sphi 0, %s156
    %s157 = sphi 0, %s154
    %s158 = sphi 0, %s157
    %s174 = sphi 0, %s158
  $region4: #{conv_block.1} parent=0 // loop_header_branch
    %14 = sbr.rel (%p12) target = $region8
  $region5: #{conv_block.1} parent=0 // loop_body
    %s16 = ssub.s32 %s11, 1
    %s17 = ssub.s32 %s11, 2
    %s27 = sadd.s32 1, %s20
    %p28 = scmp.ge.s32.totalorder %s27, 2
    %s29 = scalar_select %p28, 0, %s27
    %s30 = sadd.s32 1, %s19
    %s31 = scalar_select %p28, %s30, %s19
    %p32 = scmp.ge.s32.totalorder %s31, 2
    %s33 = scalar_select %p32, 0, %s31
    %s34 = sadd.s32 1, %s18
    %s35 = scalar_select %p32, %s34, %s18
    %p36 = scmp.ge.s32.totalorder %s35, 2
    %s37 = scalar_select %p36, 0, %s35
    %s38 = ssub.s32 %s18, %s37
    %p39 = scmp.eq.s32.totalorder %s38, 0
    %s41 = sadd.s32 %s40, 1
    %s42 = scalar_select %p39, %s40, %s41
    %p45 = pneg %p39
    %p46 = scmp.eq.s32.totalorder %s11, 7
    %p47 = por %p45, %p46
    %p48 = scmp.ne.s32.totalorder %s40, %s43
    %p49 = scmp.eq.s32.totalorder %s11, 0
    %p50 = por %p48, %p49
    %p51 = scmp.ne.s32.totalorder %s40, %s43
    %p52 = scmp.eq.s32.totalorder %s16, 7
    %p53 = por %p51, %p52
    %p54 = scmp.ne.s32.totalorder %s43, %s44
    %p55 = scmp.eq.s32.totalorder %s16, 0
    %p56 = por %p54, %p55
    %p57 = scmp.ne.s32.totalorder %s43, %s44
    %p58 = scmp.eq.s32.totalorder %s17, 7
    %p59 = por %p57, %p58
    %p61 = scmp.ne.s32.totalorder %s44, %s60
    %p62 = scmp.eq.s32.totalorder %s17, 0
    %p63 = por %p61, %p62
    %s65 = sadd.s32 %s64, 1
    %p68 = scmp.eq.s32.totalorder %s11, 7
    %p69 = scmp.ne.s32.totalorder %s64, %s66
    %p70 = scmp.eq.s32.totalorder %s11, 0
    %p71 = por %p69, %p70
    %p72 = scmp.ne.s32.totalorder %s64, %s66
    %p73 = scmp.eq.s32.totalorder %s16, 7
    %p74 = por %p72, %p73
    %p75 = scmp.ne.s32.totalorder %s66, %s67
    %p76 = scmp.eq.s32.totalorder %s16, 0
    %p77 = por %p75, %p76
    %p78 = scmp.ne.s32.totalorder %s66, %s67
    %p79 = scmp.eq.s32.totalorder %s17, 7
    %p80 = por %p78, %p79
    %p82 = scmp.ne.s32.totalorder %s67, %s81
    %p83 = scmp.eq.s32.totalorder %s17, 0
    %p84 = por %p82, %p83
    %s86 = sadd.s32 %s85, 1
    %p89 = scmp.eq.s32.totalorder %s11, 7
    %p90 = scmp.ne.s32.totalorder %s85, %s87
    %p91 = scmp.eq.s32.totalorder %s11, 0
    %p92 = por %p90, %p91
    %p93 = scmp.ne.s32.totalorder %s85, %s87
    %p94 = scmp.eq.s32.totalorder %s16, 7
    %p95 = por %p93, %p94
    %p96 = scmp.ne.s32.totalorder %s87, %s88
    %p97 = scmp.eq.s32.totalorder %s16, 0
    %p98 = por %p96, %p97
    %p99 = scmp.ne.s32.totalorder %s87, %s88
    %p100 = scmp.eq.s32.totalorder %s17, 7
    %p101 = por %p99, %p100
    %p103 = scmp.ne.s32.totalorder %s88, %s102
    %p104 = scmp.eq.s32.totalorder %s17, 0
    %p105 = por %p103, %p104
    %s107 = sadd.s32 %s106, 1
    %p110 = scmp.eq.s32.totalorder %s11, 7
    %p111 = scmp.ne.s32.totalorder %s106, %s108
    %p112 = scmp.eq.s32.totalorder %s11, 0
    %p113 = por %p111, %p112
    %p114 = scmp.ne.s32.totalorder %s106, %s108
    %p115 = scmp.eq.s32.totalorder %s16, 7
    %p116 = por %p114, %p115
    %p117 = scmp.ne.s32.totalorder %s108, %s109
    %p118 = scmp.eq.s32.totalorder %s16, 0
    %p119 = por %p117, %p118
    %p120 = scmp.ne.s32.totalorder %s108, %s109
    %p121 = scmp.eq.s32.totalorder %s17, 7
    %p122 = por %p120, %p121
    %p124 = scmp.ne.s32.totalorder %s109, %s123
    %p125 = scmp.eq.s32.totalorder %s17, 0
    %p126 = por %p124, %p125
    %s128 = sadd.s32 %s127, 1
    %p131 = scmp.eq.s32.totalorder %s11, 7
    %p132 = scmp.ne.s32.totalorder %s127, %s129
    %p133 = scmp.eq.s32.totalorder %s11, 0
    %p134 = por %p132, %p133
    %p135 = scmp.ne.s32.totalorder %s127, %s129
    %p136 = scmp.eq.s32.totalorder %s16, 7
    %p137 = por %p135, %p136
    %p138 = scmp.ne.s32.totalorder %s129, %s130
    %p139 = scmp.eq.s32.totalorder %s16, 0
    %p140 = por %p138, %p139
    %p141 = scmp.ne.s32.totalorder %s129, %s130
    %p142 = scmp.eq.s32.totalorder %s17, 7
    %p143 = por %p141, %p142
    %p145 = scmp.ne.s32.totalorder %s130, %s144
    %p146 = scmp.eq.s32.totalorder %s17, 0
    %p147 = por %p145, %p146
    %s148 = smul.u32 %s19, %s20
    %s149 = smul.u32 %s33, %s29
    %s150 = ssub.s32 %s18, %s37
    %s151 = ssub.s32 %s148, %s149
    %s152 = sor.u32 %s150, %s151
    %p153 = scmp.eq.s32.totalorder %s152, 0
    %s155 = sadd.s32 %s154, 1
    %s156 = scalar_select %p153, %s154, %s155
    %p159 = pneg %p153
    %p160 = scmp.eq.s32.totalorder %s11, 7
    %p161 = por %p159, %p160
    %p162 = scmp.ne.s32.totalorder %s154, %s157
    %p163 = scmp.eq.s32.totalorder %s11, 0
    %p164 = por %p162, %p163
    %p165 = scmp.ne.s32.totalorder %s154, %s157
    %p166 = scmp.eq.s32.totalorder %s16, 7
    %p167 = por %p165, %p166
    %p168 = scmp.ne.s32.totalorder %s157, %s158
    %p169 = scmp.eq.s32.totalorder %s16, 0
    %p170 = por %p168, %p169
    %p171 = scmp.ne.s32.totalorder %s157, %s158
    %p172 = scmp.eq.s32.totalorder %s17, 7
    %p173 = por %p171, %p172
    %p175 = scmp.ne.s32.totalorder %s158, %s174
    %p176 = scmp.eq.s32.totalorder %s17, 0
    %p177 = por %p175, %p176
    %p178 = scmp.le.s32.totalorder 1, %s11
    %p179 = scmp.lt.s32.totalorder %s11, 9
    %p180 = pnand %p178, %p179
    %p181 = pneg %p180
    // Predicated region
    $region9: #{conv_block.1} parent=5 // pred_check
      _
    $region10: #{conv_block.1} parent=5 // pred_check_branch
      %183 = sbr.rel (%p180) target = $region12
    $region11: #{conv_block.1} parent=5 // pred_region
      %s184 = ssub.s32 %s11, 1
      // Predicated region
      $region13: #{conv_block.1} parent=11 // pred_check
        %p185 = pneg %p77
      $region14: #{conv_block.1} parent=11 // pred_check_branch
        %187 = sbr.rel (%p185) target = $region16
      $region15: #{conv_block.1} parent=11 // pred_region
        _
      $region16: #{conv_block.1} parent=11 // pred_fallthru
        _
      // Predicated region
      $region17: #{conv_block.1} parent=11 // pred_check
        %p188 = pneg %p98
      $region18: #{conv_block.1} parent=11 // pred_check_branch
        %190 = sbr.rel (%p188) target = $region20
      $region19: #{conv_block.1} parent=11 // pred_region
        _
      $region20: #{conv_block.1} parent=11 // pred_fallthru
        _
      // Predicated region
      $region21: #{conv_block.1} parent=11 // pred_check
        %p191 = pneg %p119
      $region22: #{conv_block.1} parent=11 // pred_check_branch
        %193 = sbr.rel (%p191) target = $region24
      $region23: #{conv_block.1} parent=11 // pred_region
        _
      $region24: #{conv_block.1} parent=11 // pred_fallthru
        _
      // Predicated region
      $region25: #{conv_block.1} parent=11 // pred_check
        %p194 = pneg %p140
      $region26: #{conv_block.1} parent=11 // pred_check_branch
        %196 = sbr.rel (%p194) target = $region28
      $region27: #{conv_block.1} parent=11 // pred_region
        _
      $region28: #{conv_block.1} parent=11 // pred_fallthru
        _
    $region12: #{conv_block.1} parent=5 // pred_fallthru
      _
    %p197 = scmp.lt.s32.totalorder %s11, 8
    // Predicated region
    $region29: #{conv_block.1} parent=5 // pred_check
      %p198 = pneg %p197
    $region30: #{conv_block.1} parent=5 // pred_check_branch
      %200 = sbr.rel (%p198) target = $region32
    $region31: #{conv_block.1} parent=5 // pred_region
      // Predicated region
      $region33: #{conv_block.1} parent=31 // pred_check
        %p201 = pneg %p50
      $region34: #{conv_block.1} parent=31 // pred_check_branch
        %203 = sbr.rel (%p201) target = $region36
      $region35: #{conv_block.1} parent=31 // pred_region
        %p204 = scmp.lt.s32.totalorder %s18, 1
        %s205 = scalar_select %p204, %s18, 1
        %s206 = smul.addr %s205, 36
        %s207 = smul.addr %s206, 4
        %s208 = scalar_lea.vmem %s0, %s207
      $region36: #{conv_block.1} parent=31 // pred_fallthru
        _
    $region32: #{conv_block.1} parent=5 // pred_fallthru
      _
    %p209 = scmp.le.s32.totalorder 1, %s11
    %p210 = scmp.lt.s32.totalorder %s11, 9
    %p211 = pnand %p209, %p210
    %p212 = pneg %p211
    // Predicated region
    $region37: #{conv_block.1} parent=5 // pred_check
      _
    $region38: #{conv_block.1} parent=5 // pred_check_branch
      %214 = sbr.rel (%p211) target = $region40
    $region39: #{conv_block.1} parent=5 // pred_region
      %s215 = ssub.s32 %s11, 1
      %p216 = scmp.lt.s32.totalorder %s21, 1
      %s217 = scalar_select %p216, %s21, 1
      %s218 = smul.addr %s217, 36
      %s219 = smul.addr %s218, 4
      %s220 = scalar_lea.vmem %s0, %s219
      %p221 = pneg %p56
      %p222 = pneg %p53
      %p223 = pneg %p77
      %p224 = pneg %p74
      %p225 = pneg %p98
      %p226 = pneg %p95
      %p227 = pneg %p119
      %p228 = pneg %p116
      %p229 = pneg %p140
      %p230 = pneg %p137
      %p231 = pneg %p170
      %p232 = pneg %p167
      %s233 = smul.u32 %s22, %s23
      %s234 = smul.u32 16, %s233
      %p235 = scmp.lt.s32.totalorder %s21, 1
      %s236 = scalar_select %p235, %s21, 1
      %p237 = scmp.lt.s32.totalorder %s234, 31
      %s238 = scalar_select %p237, %s234, 31
      %s239 = smul.addr %s236, 32
      %s240 = sadd.s32 %s238, %s239
      %s241 = smul.addr %s240, 8
      %s242 = scalar_lea.vmem %s5, %s241
      %p243 = scmp.lt.s32.totalorder %s21, 1
      %s244 = scalar_select %p243, %s21, 1
      %s245 = smul.addr %s244, 36
      %s246 = smul.addr %s245, 4
      %s247 = scalar_lea.vmem %s0, %s246
      %s248 = smul.u32 %s22, %s23
      %s249 = smul.u32 16, %s248
      %p250 = scmp.lt.s32.totalorder %s21, 1
      %s251 = scalar_select %p250, %s21, 1
      %p252 = scmp.lt.s32.totalorder %s249, 31
      %s253 = scalar_select %p252, %s249, 31
      %s254 = smul.addr %s251, 32
      %s255 = sadd.s32 %s253, %s254
      %s256 = smul.addr %s255, 8
      %s257 = scalar_lea.vmem %s5, %s256
      %s258 = smul.u32 %s22, %s23
      %s259 = smul.u32 16, %s258
      %p261 = scmp.eq.s32.totalorder %s22, 0
      // Predicated region
      $region41: #{conv_block.1} parent=39 // pred_check
        %p262 = pneg %p261
      $region42: #{conv_block.1} parent=39 // pred_check_branch
        %264 = sbr.rel (%p262) target = $region44
      $region43: #{conv_block.1} parent=39 // pred_region
        %p265 = scmp.eq.s32.totalorder %s23, 0
        // Predicated region
        $region45: #{conv_block.1} parent=43 // pred_check
          %p266 = pneg %p265
        $region46: #{conv_block.1} parent=43 // pred_check_branch
          %268 = sbr.rel (%p266) target = $region48
        $region47: #{conv_block.1} parent=43 // pred_region
          %269 = vst [vmem:[#allocation3] sm:$0x1] 0.0
          %270 = vst [vmem:[#allocation4] sm:$0x1] 0.0
        $region48: #{conv_block.1} parent=43 // pred_fallthru
          _
        %s271 = smul.u32 %s23, 8
        %s272 = smul.u32 %s271, 2
        %s273 = smul.addr %s272, 4
        %s274 = scalar_lea.vmem %s247, %s273
        %v275 = vld [vmem:[%s274] sm:$0xf]
        %v276 = vld [vmem:[%s274 + $0x4] sm:$0xf]
        %v277 = vld [vmem:[%s274 + $0x8] sm:$0xf]
        %v278 = vld [vmem:[%s274 + $0xc] sm:$0xf]
        %v279 = vld [vmem:[%s274 + $0x10] sm:$0xf]
        %v280 = vld [vmem:[%s274 + $0x14] sm:$0xf]
        %v281 = vld [vmem:[%s274 + $0x18] sm:$0xf]
        %v282 = vld [vmem:[%s274 + $0x1c] sm:$0xf]
        %v283 = vld [vmem:[%s274 + $0x20] sm:$0xf]
        %v284 = vld [vmem:[%s274 + $0x24] sm:$0xf]
        %v285 = vld [vmem:[%s274 + $0x28] sm:$0xf]
        %v286 = vld [vmem:[%s274 + $0x2c] sm:$0xf]
        %v287 = vld [vmem:[%s274 + $0x30] sm:$0xf]
        %v288 = vld [vmem:[%s274 + $0x34] sm:$0xf]
        %v289 = vld [vmem:[%s274 + $0x38] sm:$0xf]
        %v290 = vld [vmem:[%s274 + $0x3c] sm:$0xf]
        %v291 = vld [vmem:[%s1] sm:$0xf]
        %v292 = vld [vmem:[%s1 + $0x4] sm:$0xf]
        %v293 = vld [vmem:[%s1 + $0x8] sm:$0xf]
        %v294 = vld [vmem:[%s1 + $0xc] sm:$0xf]
        %v295 = vld [vmem:[%s1 + $0x10] sm:$0xf]
        %v296 = vld [vmem:[%s1 + $0x14] sm:$0xf]
        %v297 = vld [vmem:[%s1 + $0x18] sm:$0xf]
        %v298 = vld [vmem:[%s1 + $0x1c] sm:$0xf]
        %v299 = vld [vmem:[%s1 + $0x20] sm:$0xf]
        %v300 = vld [vmem:[%s1 + $0x24] sm:$0xf]
        %v301 = vld [vmem:[%s1 + $0x28] sm:$0xf]
        %v302 = vld [vmem:[%s1 + $0x2c] sm:$0xf]
        %v303 = vld [vmem:[%s1 + $0x30] sm:$0xf]
        %v304 = vld [vmem:[%s1 + $0x34] sm:$0xf]
        %v305 = vld [vmem:[%s1 + $0x38] sm:$0xf]
        %v306 = vld [vmem:[%s1 + $0x3c] sm:$0xf]
        %s307 = sadd.s32 %s271, 1
        %s308 = smul.u32 %s307, 2
        %s309 = smul.addr %s308, 4
        %s310 = scalar_lea.vmem %s247, %s309
        %v311 = vld [vmem:[%s310] sm:$0xf]
        %v312 = vld [vmem:[%s310 + $0x4] sm:$0xf]
        %v313 = vld [vmem:[%s310 + $0x8] sm:$0xf]
        %v314 = vld [vmem:[%s310 + $0xc] sm:$0xf]
        %v315 = vld [vmem:[%s310 + $0x10] sm:$0xf]
        %v316 = vld [vmem:[%s310 + $0x14] sm:$0xf]
        %v317 = vld [vmem:[%s310 + $0x18] sm:$0xf]
        %v318 = vld [vmem:[%s310 + $0x1c] sm:$0xf]
        %v319 = vld [vmem:[%s310 + $0x20] sm:$0xf]
        %v320 = vld [vmem:[%s310 + $0x24] sm:$0xf]
        %v321 = vld [vmem:[%s310 + $0x28] sm:$0xf]
        %v322 = vld [vmem:[%s310 + $0x2c] sm:$0xf]
        %v323 = vld [vmem:[%s310 + $0x30] sm:$0xf]
        %v324 = vld [vmem:[%s310 + $0x34] sm:$0xf]
        %v325 = vld [vmem:[%s310 + $0x38] sm:$0xf]
        %v326 = vld [vmem:[%s310 + $0x3c] sm:$0xf]
        %s327 = scalar_lea.vmem %s1, 64
        %v328 = vld [vmem:[%s327] sm:$0xf]
        %v329 = vld [vmem:[%s327 + $0x4] sm:$0xf]
        %v330 = vld [vmem:[%s327 + $0x8] sm:$0xf]
        %v331 = vld [vmem:[%s327 + $0xc] sm:$0xf]
        %v332 = vld [vmem:[%s327 + $0x10] sm:$0xf]
        %v333 = vld [vmem:[%s327 + $0x14] sm:$0xf]
        %v334 = vld [vmem:[%s327 + $0x18] sm:$0xf]
        %v335 = vld [vmem:[%s327 + $0x1c] sm:$0xf]
        %v336 = vld [vmem:[%s327 + $0x20] sm:$0xf]
        %v337 = vld [vmem:[%s327 + $0x24] sm:$0xf]
        %v338 = vld [vmem:[%s327 + $0x28] sm:$0xf]
        %v339 = vld [vmem:[%s327 + $0x2c] sm:$0xf]
        %v340 = vld [vmem:[%s327 + $0x30] sm:$0xf]
        %v341 = vld [vmem:[%s327 + $0x34] sm:$0xf]
        %v342 = vld [vmem:[%s327 + $0x38] sm:$0xf]
        %v343 = vld [vmem:[%s327 + $0x3c] sm:$0xf]
        %v360 = vunpack.c.l.b16 %v311
        %v361 = vunpack.c.l.b16 %v312
        %v362 = vunpack.c.l.b16 %v313
        %v363 = vunpack.c.l.b16 %v314
        %v364 = vunpack.c.l.b16 %v315
        %v365 = vunpack.c.l.b16 %v316
        %v366 = vunpack.c.l.b16 %v317
        %v367 = vunpack.c.l.b16 %v318
        %v368 = vunpack.c.l.b16 %v319
        %v369 = vunpack.c.l.b16 %v320
        %v370 = vunpack.c.l.b16 %v321
        %v371 = vunpack.c.l.b16 %v322
        %v372 = vunpack.c.l.b16 %v323
        %v373 = vunpack.c.l.b16 %v324
        %v374 = vunpack.c.l.b16 %v325
        %v375 = vunpack.c.l.b16 %v326
        %v376 = vpack.c.b16 %v361, %v360
        %v377 = vpack.c.b16 %v363, %v362
        %v378 = vpack.c.b16 %v365, %v364
        %v379 = vpack.c.b16 %v367, %v366
        %v380 = vpack.c.b16 %v369, %v368
        %v381 = vpack.c.b16 %v371, %v370
        %v382 = vpack.c.b16 %v373, %v372
        %v383 = vpack.c.b16 %v375, %v374
        %v408 = vunpack.c.l.b16 %v328
        %v409 = vunpack.c.l.b16 %v329
        %v410 = vunpack.c.l.b16 %v330
        %v411 = vunpack.c.l.b16 %v331
        %v412 = vunpack.c.l.b16 %v332
        %v413 = vunpack.c.l.b16 %v333
        %v414 = vunpack.c.l.b16 %v334
        %v415 = vunpack.c.l.b16 %v335
        %v416 = vunpack.c.l.b16 %v336
        %v417 = vunpack.c.l.b16 %v337
        %v418 = vunpack.c.l.b16 %v338
        %v419 = vunpack.c.l.b16 %v339
        %v420 = vunpack.c.l.b16 %v340
        %v421 = vunpack.c.l.b16 %v341
        %v422 = vunpack.c.l.b16 %v342
        %v423 = vunpack.c.l.b16 %v343
        %v424 = vpack.c.b16 %v409, %v408
        %v425 = vpack.c.b16 %v411, %v410
        %v426 = vpack.c.b16 %v413, %v412
        %v427 = vpack.c.b16 %v415, %v414
        %v428 = vpack.c.b16 %v417, %v416
        %v429 = vpack.c.b16 %v419, %v418
        %v430 = vpack.c.b16 %v421, %v420
        %v431 = vpack.c.b16 %v423, %v422
        %440 = vmatprep.subr.bf16.mxu0 0
        %441 = vmatpush1.bf16.msra.mxu0 %v431
        %442 = vmatprep.subr.bf16.mxu0 0
        %443 = vmatpush1.bf16.msra.mxu0 %v430
        %444 = vmatprep.subr.bf16.mxu0 0
        %445 = vmatpush1.bf16.msra.mxu0 %v429
        %446 = vmatprep.subr.bf16.mxu0 0
        %447 = vmatpush1.bf16.msra.mxu0 %v428
        %448 = vmatprep.subr.bf16.mxu0 0
        %449 = vmatpush1.bf16.msra.mxu0 %v427
        %450 = vmatprep.subr.bf16.mxu0 0
        %451 = vmatpush1.bf16.msra.mxu0 %v426
        %452 = vmatprep.subr.bf16.mxu0 0
        %453 = vmatpush1.bf16.msra.mxu0 %v425
        %454 = vmatprep.subr.bf16.mxu0 0
        %455 = vmatpush1.bf16.msra.mxu0 %v424
        %456 = vmatprep.subr.bf16.mxu0 0
        %457 = vmatpush2.bf16.msra.mxu0 0
        %458 = vmatprep.subr.bf16.mxu0 0
        %459 = vmatpush2.bf16.msra.mxu0 0
        %460 = vmatprep.subr.bf16.mxu0 0
        %461 = vmatpush2.bf16.msra.mxu0 0
        %462 = vmatprep.subr.bf16.mxu0 0
        %463 = vmatpush2.bf16.msra.mxu0 0
        %464 = vmatprep.subr.bf16.mxu0 0
        %465 = vmatpush2.bf16.msra.mxu0 0
        %466 = vmatprep.subr.bf16.mxu0 0
        %467 = vmatpush2.bf16.msra.mxu0 0
        %468 = vmatprep.subr.bf16.mxu0 0
        %469 = vmatpush2.bf16.msra.mxu0 0
        %470 = vmatprep.subr.bf16.mxu0 0
        %471 = vmatpush2.bf16.msra.mxu0 0
        %472 = vmatprep.mubr.bf16.mxu0 0
        %473 = vmatmul.mubr.bf16.gmra.mxu0 %v376
        %v474 = vpop.f32.mrf.mxu0
        %v475 = vadd.f32 0.0, %v474
        %v476 = vpop.f32.mrf.mxu0
        %v477 = vpop.f32.mrf.mxu0
        %v478 = vadd.f32 0.0, %v477
        %v479 = vpop.f32.mrf.mxu0
        %480 = vmatprep.mubr.bf16.mxu0 0
        %481 = vmatmul.mubr.bf16.gmra.mxu0 %v377
        %v482 = vpop.f32.mrf.mxu0
        %v483 = vadd.f32 0.0, %v482
        %v484 = vpop.f32.mrf.mxu0
        %v485 = vpop.f32.mrf.mxu0
        %v486 = vadd.f32 0.0, %v485
        %v487 = vpop.f32.mrf.mxu0
        %488 = vmatprep.mubr.bf16.mxu0 0
        %489 = vmatmul.mubr.bf16.gmra.mxu0 %v378
        %v490 = vpop.f32.mrf.mxu0
        %v491 = vadd.f32 0.0, %v490
        %v492 = vpop.f32.mrf.mxu0
        %v493 = vpop.f32.mrf.mxu0
        %v494 = vadd.f32 0.0, %v493
        %v495 = vpop.f32.mrf.mxu0
        %496 = vmatprep.mubr.bf16.mxu0 0
        %497 = vmatmul.mubr.bf16.gmra.mxu0 %v379
        %v498 = vpop.f32.mrf.mxu0
        %v499 = vadd.f32 0.0, %v498
        %v500 = vpop.f32.mrf.mxu0
        %v501 = vpop.f32.mrf.mxu0
        %v502 = vadd.f32 0.0, %v501
        %v503 = vpop.f32.mrf.mxu0
        %504 = vmatprep.mubr.bf16.mxu0 0
        %505 = vmatmul.mubr.bf16.gmra.mxu0 %v380
        %v506 = vpop.f32.mrf.mxu0
        %v507 = vadd.f32 0.0, %v506
        %v508 = vpop.f32.mrf.mxu0
        %v509 = vpop.f32.mrf.mxu0
        %v510 = vadd.f32 0.0, %v509
        %v511 = vpop.f32.mrf.mxu0
        %512 = vmatprep.mubr.bf16.mxu0 0
        %513 = vmatmul.mubr.bf16.gmra.mxu0 %v381
        %v514 = vpop.f32.mrf.mxu0
        %v515 = vadd.f32 0.0, %v514
        %v516 = vpop.f32.mrf.mxu0
        %v517 = vpop.f32.mrf.mxu0
        %v518 = vadd.f32 0.0, %v517
        %v519 = vpop.f32.mrf.mxu0
        %520 = vmatprep.mubr.bf16.mxu0 0
        %521 = vmatmul.mubr.bf16.gmra.mxu0 %v382
        %v522 = vpop.f32.mrf.mxu0
        %v523 = vadd.f32 0.0, %v522
        %v524 = vpop.f32.mrf.mxu0
        %v525 = vpop.f32.mrf.mxu0
        %v526 = vadd.f32 0.0, %v525
        %v527 = vpop.f32.mrf.mxu0
        %528 = vmatprep.mubr.bf16.mxu0 0
        %529 = vmatmul.mubr.bf16.gmra.mxu0 %v383
        %v530 = vpop.f32.mrf.mxu0
        %v531 = vadd.f32 0.0, %v530
        %v532 = vpop.f32.mrf.mxu0
        %v533 = vpop.f32.mrf.mxu0
        %v534 = vadd.f32 0.0, %v533
        %v535 = vpop.f32.mrf.mxu0
        %536 = vdwg.mxu0
        %v553 = vunpack.c.l.b16 %v275
        %v554 = vunpack.c.l.b16 %v276
        %v555 = vunpack.c.l.b16 %v277
        %v556 = vunpack.c.l.b16 %v278
        %v557 = vunpack.c.l.b16 %v279
        %v558 = vunpack.c.l.b16 %v280
        %v559 = vunpack.c.l.b16 %v281
        %v560 = vunpack.c.l.b16 %v282
        %v561 = vunpack.c.l.b16 %v283
        %v562 = vunpack.c.l.b16 %v284
        %v563 = vunpack.c.l.b16 %v285
        %v564 = vunpack.c.l.b16 %v286
        %v565 = vunpack.c.l.b16 %v287
        %v566 = vunpack.c.l.b16 %v288
        %v567 = vunpack.c.l.b16 %v289
        %v568 = vunpack.c.l.b16 %v290
        %v569 = vpack.c.b16 %v554, %v553
        %v570 = vpack.c.b16 %v556, %v555
        %v571 = vpack.c.b16 %v558, %v557
        %v572 = vpack.c.b16 %v560, %v559
        %v573 = vpack.c.b16 %v562, %v561
        %v574 = vpack.c.b16 %v564, %v563
        %v575 = vpack.c.b16 %v566, %v565
        %v576 = vpack.c.b16 %v568, %v567
        %v601 = vunpack.c.l.b16 %v291
        %v602 = vunpack.c.l.b16 %v292
        %v603 = vunpack.c.l.b16 %v293
        %v604 = vunpack.c.l.b16 %v294
        %v605 = vunpack.c.l.b16 %v295
        %v606 = vunpack.c.l.b16 %v296
        %v607 = vunpack.c.l.b16 %v297
        %v608 = vunpack.c.l.b16 %v298
        %v609 = vunpack.c.l.b16 %v299
        %v610 = vunpack.c.l.b16 %v300
        %v611 = vunpack.c.l.b16 %v301
        %v612 = vunpack.c.l.b16 %v302
        %v613 = vunpack.c.l.b16 %v303
        %v614 = vunpack.c.l.b16 %v304
        %v615 = vunpack.c.l.b16 %v305
        %v616 = vunpack.c.l.b16 %v306
        %v617 = vpack.c.b16 %v602, %v601
        %v618 = vpack.c.b16 %v604, %v603
        %v619 = vpack.c.b16 %v606, %v605
        %v620 = vpack.c.b16 %v608, %v607
        %v621 = vpack.c.b16 %v610, %v609
        %v622 = vpack.c.b16 %v612, %v611
        %v623 = vpack.c.b16 %v614, %v613
        %v624 = vpack.c.b16 %v616, %v615
        %633 = vmatprep.subr.bf16.mxu0 0
        %634 = vmatpush1.bf16.msra.mxu0 %v624
        %635 = vmatprep.subr.bf16.mxu0 0
        %636 = vmatpush1.bf16.msra.mxu0 %v623
        %637 = vmatprep.subr.bf16.mxu0 0
        %638 = vmatpush1.bf16.msra.mxu0 %v622
        %639 = vmatprep.subr.bf16.mxu0 0
        %640 = vmatpush1.bf16.msra.mxu0 %v621
        %641 = vmatprep.subr.bf16.mxu0 0
        %642 = vmatpush1.bf16.msra.mxu0 %v620
        %643 = vmatprep.subr.bf16.mxu0 0
        %644 = vmatpush1.bf16.msra.mxu0 %v619
        %645 = vmatprep.subr.bf16.mxu0 0
        %646 = vmatpush1.bf16.msra.mxu0 %v618
        %647 = vmatprep.subr.bf16.mxu0 0
        %648 = vmatpush1.bf16.msra.mxu0 %v617
        %649 = vmatprep.subr.bf16.mxu0 0
        %650 = vmatpush2.bf16.msra.mxu0 0
        %651 = vmatprep.subr.bf16.mxu0 0
        %652 = vmatpush2.bf16.msra.mxu0 0
        %653 = vmatprep.subr.bf16.mxu0 0
        %654 = vmatpush2.bf16.msra.mxu0 0
        %655 = vmatprep.subr.bf16.mxu0 0
        %656 = vmatpush2.bf16.msra.mxu0 0
        %657 = vmatprep.subr.bf16.mxu0 0
        %658 = vmatpush2.bf16.msra.mxu0 0
        %659 = vmatprep.subr.bf16.mxu0 0
        %660 = vmatpush2.bf16.msra.mxu0 0
        %661 = vmatprep.subr.bf16.mxu0 0
        %662 = vmatpush2.bf16.msra.mxu0 0
        %663 = vmatprep.subr.bf16.mxu0 0
        %664 = vmatpush2.bf16.msra.mxu0 0
        %665 = vmatprep.mubr.bf16.mxu0 0
        %666 = vmatmul.mubr.bf16.gmra.mxu0 %v569
        %v667 = vpop.f32.mrf.mxu0
        %v668 = vadd.f32 %v475, %v667
        %v669 = vpop.f32.mrf.mxu0
        %v670 = vpop.f32.mrf.mxu0
        %v671 = vadd.f32 %v478, %v670
        %v672 = vpop.f32.mrf.mxu0
        %673 = vmatprep.mubr.bf16.mxu0 0
        %674 = vmatmul.mubr.bf16.gmra.mxu0 %v570
        %v675 = vpop.f32.mrf.mxu0
        %v676 = vadd.f32 %v483, %v675
        %v677 = vpop.f32.mrf.mxu0
        %v678 = vpop.f32.mrf.mxu0
        %v679 = vadd.f32 %v486, %v678
        %v680 = vpop.f32.mrf.mxu0
        %681 = vmatprep.mubr.bf16.mxu0 0
        %682 = vmatmul.mubr.bf16.gmra.mxu0 %v571
        %v683 = vpop.f32.mrf.mxu0
        %v684 = vadd.f32 %v491, %v683
        %v685 = vpop.f32.mrf.mxu0
        %v686 = vpop.f32.mrf.mxu0
        %v687 = vadd.f32 %v494, %v686
        %v688 = vpop.f32.mrf.mxu0
        %689 = vmatprep.mubr.bf16.mxu0 0
        %690 = vmatmul.mubr.bf16.gmra.mxu0 %v572
        %v691 = vpop.f32.mrf.mxu0
        %v692 = vadd.f32 %v499, %v691
        %v693 = vpop.f32.mrf.mxu0
        %v694 = vpop.f32.mrf.mxu0
        %v695 = vadd.f32 %v502, %v694
        %v696 = vpop.f32.mrf.mxu0
        %697 = vmatprep.mubr.bf16.mxu0 0
        %698 = vmatmul.mubr.bf16.gmra.mxu0 %v573
        %v699 = vpop.f32.mrf.mxu0
        %v700 = vadd.f32 %v507, %v699
        %v701 = vpop.f32.mrf.mxu0
        %v702 = vpop.f32.mrf.mxu0
        %v703 = vadd.f32 %v510, %v702
        %v704 = vpop.f32.mrf.mxu0
        %705 = vmatprep.mubr.bf16.mxu0 0
        %706 = vmatmul.mubr.bf16.gmra.mxu0 %v574
        %v707 = vpop.f32.mrf.mxu0
        %v708 = vadd.f32 %v515, %v707
        %v709 = vpop.f32.mrf.mxu0
        %v710 = vpop.f32.mrf.mxu0
        %v711 = vadd.f32 %v518, %v710
        %v712 = vpop.f32.mrf.mxu0
        %713 = vmatprep.mubr.bf16.mxu0 0
        %714 = vmatmul.mubr.bf16.gmra.mxu0 %v575
        %v715 = vpop.f32.mrf.mxu0
        %v716 = vadd.f32 %v523, %v715
        %v717 = vpop.f32.mrf.mxu0
        %v718 = vpop.f32.mrf.mxu0
        %v719 = vadd.f32 %v526, %v718
        %v720 = vpop.f32.mrf.mxu0
        %721 = vmatprep.mubr.bf16.mxu0 0
        %722 = vmatmul.mubr.bf16.gmra.mxu0 %v576
        %v723 = vpop.f32.mrf.mxu0
        %v724 = vadd.f32 %v531, %v723
        %v725 = vpop.f32.mrf.mxu0
        %v726 = vpop.f32.mrf.mxu0
        %v727 = vadd.f32 %v534, %v726
        %v728 = vpop.f32.mrf.mxu0
        %729 = vdwg.mxu0
        %s730 = sadd.s32 %s271, 2
        %s731 = smul.u32 %s730, 2
        %s732 = smul.addr %s731, 4
        %s733 = scalar_lea.vmem %s247, %s732
        %v734 = vld [vmem:[%s733] sm:$0xf]
        %v735 = vld [vmem:[%s733 + $0x4] sm:$0xf]
        %v736 = vld [vmem:[%s733 + $0x8] sm:$0xf]
        %v737 = vld [vmem:[%s733 + $0xc] sm:$0xf]
        %v738 = vld [vmem:[%s733 + $0x10] sm:$0xf]
        %v739 = vld [vmem:[%s733 + $0x14] sm:$0xf]
        %v740 = vld [vmem:[%s733 + $0x18] sm:$0xf]
        %v741 = vld [vmem:[%s733 + $0x1c] sm:$0xf]
        %v742 = vld [vmem:[%s733 + $0x20] sm:$0xf]
        %v743 = vld [vmem:[%s733 + $0x24] sm:$0xf]
        %v744 = vld [vmem:[%s733 + $0x28] sm:$0xf]
        %v745 = vld [vmem:[%s733 + $0x2c] sm:$0xf]
        %v746 = vld [vmem:[%s733 + $0x30] sm:$0xf]
        %v747 = vld [vmem:[%s733 + $0x34] sm:$0xf]
        %v748 = vld [vmem:[%s733 + $0x38] sm:$0xf]
        %v749 = vld [vmem:[%s733 + $0x3c] sm:$0xf]
        %s750 = scalar_lea.vmem %s1, 128
        %v751 = vld [vmem:[%s750] sm:$0xf]
        %v752 = vld [vmem:[%s750 + $0x4] sm:$0xf]
        %v753 = vld [vmem:[%s750 + $0x8] sm:$0xf]
        %v754 = vld [vmem:[%s750 + $0xc] sm:$0xf]
        %v755 = vld [vmem:[%s750 + $0x10] sm:$0xf]
        %v756 = vld [vmem:[%s750 + $0x14] sm:$0xf]
        %v757 = vld [vmem:[%s750 + $0x18] sm:$0xf]
        %v758 = vld [vmem:[%s750 + $0x1c] sm:$0xf]
        %v759 = vld [vmem:[%s750 + $0x20] sm:$0xf]
        %v760 = vld [vmem:[%s750 + $0x24] sm:$0xf]
        %v761 = vld [vmem:[%s750 + $0x28] sm:$0xf]
        %v762 = vld [vmem:[%s750 + $0x2c] sm:$0xf]
        %v763 = vld [vmem:[%s750 + $0x30] sm:$0xf]
        %v764 = vld [vmem:[%s750 + $0x34] sm:$0xf]
        %v765 = vld [vmem:[%s750 + $0x38] sm:$0xf]
        %v766 = vld [vmem:[%s750 + $0x3c] sm:$0xf]
        %v783 = vunpack.c.l.b16 %v734
        %v784 = vunpack.c.l.b16 %v735
        %v785 = vunpack.c.l.b16 %v736
        %v786 = vunpack.c.l.b16 %v737
        %v787 = vunpack.c.l.b16 %v738
        %v788 = vunpack.c.l.b16 %v739
        %v789 = vunpack.c.l.b16 %v740
        %v790 = vunpack.c.l.b16 %v741
        %v791 = vunpack.c.l.b16 %v742
        %v792 = vunpack.c.l.b16 %v743
        %v793 = vunpack.c.l.b16 %v744
        %v794 = vunpack.c.l.b16 %v745
        %v795 = vunpack.c.l.b16 %v746
        %v796 = vunpack.c.l.b16 %v747
        %v797 = vunpack.c.l.b16 %v748
        %v798 = vunpack.c.l.b16 %v749
        %v799 = vpack.c.b16 %v784, %v783
        %v800 = vpack.c.b16 %v786, %v785
        %v801 = vpack.c.b16 %v788, %v787
        %v802 = vpack.c.b16 %v790, %v789
        %v803 = vpack.c.b16 %v792, %v791
        %v804 = vpack.c.b16 %v794, %v793
        %v805 = vpack.c.b16 %v796, %v795
        %v806 = vpack.c.b16 %v798, %v797
        %v831 = vunpack.c.l.b16 %v751
        %v832 = vunpack.c.l.b16 %v752
        %v833 = vunpack.c.l.b16 %v753
        %v834 = vunpack.c.l.b16 %v754
        %v835 = vunpack.c.l.b16 %v755
        %v836 = vunpack.c.l.b16 %v756
        %v837 = vunpack.c.l.b16 %v757
        %v838 = vunpack.c.l.b16 %v758
        %v839 = vunpack.c.l.b16 %v759
        %v840 = vunpack.c.l.b16 %v760
        %v841 = vunpack.c.l.b16 %v761
        %v842 = vunpack.c.l.b16 %v762
        %v843 = vunpack.c.l.b16 %v763
        %v844 = vunpack.c.l.b16 %v764
        %v845 = vunpack.c.l.b16 %v765
        %v846 = vunpack.c.l.b16 %v766
        %v847 = vpack.c.b16 %v832, %v831
        %v848 = vpack.c.b16 %v834, %v833
        %v849 = vpack.c.b16 %v836, %v835
        %v850 = vpack.c.b16 %v838, %v837
        %v851 = vpack.c.b16 %v840, %v839
        %v852 = vpack.c.b16 %v842, %v841
        %v853 = vpack.c.b16 %v844, %v843
        %v854 = vpack.c.b16 %v846, %v845
        %863 = vmatprep.subr.bf16.mxu0 0
        %864 = vmatpush1.bf16.msra.mxu0 %v854
        %865 = vmatprep.subr.bf16.mxu0 0
        %866 = vmatpush1.bf16.msra.mxu0 %v853
        %867 = vmatprep.subr.bf16.mxu0 0
        %868 = vmatpush1.bf16.msra.mxu0 %v852
        %869 = vmatprep.subr.bf16.mxu0 0
        %870 = vmatpush1.bf16.msra.mxu0 %v851
        %871 = vmatprep.subr.bf16.mxu0 0
        %872 = vmatpush1.bf16.msra.mxu0 %v850
        %873 = vmatprep.subr.bf16.mxu0 0
        %874 = vmatpush1.bf16.msra.mxu0 %v849
        %875 = vmatprep.subr.bf16.mxu0 0
        %876 = vmatpush1.bf16.msra.mxu0 %v848
        %877 = vmatprep.subr.bf16.mxu0 0
        %878 = vmatpush1.bf16.msra.mxu0 %v847
        %879 = vmatprep.subr.bf16.mxu0 0
        %880 = vmatpush2.bf16.msra.mxu0 0
        %881 = vmatprep.subr.bf16.mxu0 0
        %882 = vmatpush2.bf16.msra.mxu0 0
        %883 = vmatprep.subr.bf16.mxu0 0
        %884 = vmatpush2.bf16.msra.mxu0 0
        %885 = vmatprep.subr.bf16.mxu0 0
        %886 = vmatpush2.bf16.msra.mxu0 0
        %887 = vmatprep.subr.bf16.mxu0 0
        %888 = vmatpush2.bf16.msra.mxu0 0
        %889 = vmatprep.subr.bf16.mxu0 0
        %890 = vmatpush2.bf16.msra.mxu0 0
        %891 = vmatprep.subr.bf16.mxu0 0
        %892 = vmatpush2.bf16.msra.mxu0 0
        %893 = vmatprep.subr.bf16.mxu0 0
        %894 = vmatpush2.bf16.msra.mxu0 0
        %895 = vmatprep.mubr.bf16.mxu0 0
        %896 = vmatmul.mubr.bf16.gmra.mxu0 %v799
        %v897 = vpop.f32.mrf.mxu0
        %v898 = vadd.f32 0.0, %v897
        %v899 = vpop.f32.mrf.mxu0
        %v900 = vpop.f32.mrf.mxu0
        %v901 = vadd.f32 0.0, %v900
        %v902 = vpop.f32.mrf.mxu0
        %903 = vmatprep.mubr.bf16.mxu0 0
        %904 = vmatmul.mubr.bf16.gmra.mxu0 %v800
        %v905 = vpop.f32.mrf.mxu0
        %v906 = vadd.f32 0.0, %v905
        %v907 = vpop.f32.mrf.mxu0
        %v908 = vpop.f32.mrf.mxu0
        %v909 = vadd.f32 0.0, %v908
        %v910 = vpop.f32.mrf.mxu0
        %911 = vmatprep.mubr.bf16.mxu0 0
        %912 = vmatmul.mubr.bf16.gmra.mxu0 %v801
        %v913 = vpop.f32.mrf.mxu0
        %v914 = vadd.f32 0.0, %v913
        %v915 = vpop.f32.mrf.mxu0
        %v916 = vpop.f32.mrf.mxu0
        %v917 = vadd.f32 0.0, %v916
        %v918 = vpop.f32.mrf.mxu0
        %919 = vmatprep.mubr.bf16.mxu0 0
        %920 = vmatmul.mubr.bf16.gmra.mxu0 %v802
        %v921 = vpop.f32.mrf.mxu0
        %v922 = vadd.f32 0.0, %v921
        %v923 = vpop.f32.mrf.mxu0
        %v924 = vpop.f32.mrf.mxu0
        %v925 = vadd.f32 0.0, %v924
        %v926 = vpop.f32.mrf.mxu0
        %927 = vmatprep.mubr.bf16.mxu0 0
        %928 = vmatmul.mubr.bf16.gmra.mxu0 %v803
        %v929 = vpop.f32.mrf.mxu0
        %v930 = vadd.f32 0.0, %v929
        %v931 = vpop.f32.mrf.mxu0
        %v932 = vpop.f32.mrf.mxu0
        %v933 = vadd.f32 0.0, %v932
        %v934 = vpop.f32.mrf.mxu0
        %935 = vmatprep.mubr.bf16.mxu0 0
        %936 = vmatmul.mubr.bf16.gmra.mxu0 %v804
        %v937 = vpop.f32.mrf.mxu0
        %v938 = vadd.f32 0.0, %v937
        %v939 = vpop.f32.mrf.mxu0
        %v940 = vpop.f32.mrf.mxu0
        %v941 = vadd.f32 0.0, %v940
        %v942 = vpop.f32.mrf.mxu0
        %943 = vmatprep.mubr.bf16.mxu0 0
        %944 = vmatmul.mubr.bf16.gmra.mxu0 %v805
        %v945 = vpop.f32.mrf.mxu0
        %v946 = vadd.f32 0.0, %v945
        %v947 = vpop.f32.mrf.mxu0
        %v948 = vpop.f32.mrf.mxu0
        %v949 = vadd.f32 0.0, %v948
        %v950 = vpop.f32.mrf.mxu0
        %951 = vmatprep.mubr.bf16.mxu0 0
        %952 = vmatmul.mubr.bf16.gmra.mxu0 %v806
        %v953 = vpop.f32.mrf.mxu0
        %v954 = vadd.f32 0.0, %v953
        %v955 = vpop.f32.mrf.mxu0
        %v956 = vpop.f32.mrf.mxu0
        %v957 = vadd.f32 0.0, %v956
        %v958 = vpop.f32.mrf.mxu0
        %959 = vdwg.mxu0
        %v960 = vadd.f32 %v668, %v898
        %v961 = vadd.f32 %v671, %v901
        %v962 = vadd.f32 %v676, %v906
        %v963 = vadd.f32 %v679, %v909
        %v964 = vadd.f32 %v684, %v914
        %v965 = vadd.f32 %v687, %v917
        %v966 = vadd.f32 %v692, %v922
        %v967 = vadd.f32 %v695, %v925
        %v968 = vadd.f32 %v700, %v930
        %v969 = vadd.f32 %v703, %v933
        %v970 = vadd.f32 %v708, %v938
        %v971 = vadd.f32 %v711, %v941
        %v972 = vadd.f32 %v716, %v946
        %v973 = vadd.f32 %v719, %v949
        %v974 = vadd.f32 %v724, %v954
        %v975 = vadd.f32 %v727, %v957
        %v976 = vld [vmem:[%s2] sm:$0x1]
        %v978 = vlaneseq
        %v979 = vshrl.u32 %v978, 7
        %v980 = vsub.s32 0, %v979
        %v981 = vrot.slane %v976, %v980
        %v983 = vadd.f32 %v960, %v981
        %v984 = vadd.f32 %v961, %v981
        %v985 = vadd.f32 %v962, %v981
        %v986 = vadd.f32 %v963, %v981
        %v987 = vadd.f32 %v964, %v981
        %v988 = vadd.f32 %v965, %v981
        %v989 = vadd.f32 %v966, %v981
        %v990 = vadd.f32 %v967, %v981
        %v991 = vadd.f32 %v968, %v981
        %v992 = vadd.f32 %v969, %v981
        %v993 = vadd.f32 %v970, %v981
        %v994 = vadd.f32 %v971, %v981
        %v995 = vadd.f32 %v972, %v981
        %v996 = vadd.f32 %v973, %v981
        %v997 = vadd.f32 %v974, %v981
        %v998 = vadd.f32 %v975, %v981
        %v999 = vld [vmem:[#allocation3] sm:$0x1]
        %v1000 = vadd.f32 %v983, %v984
        %v1001 = vadd.f32 %v1000, %v985
        %v1002 = vadd.f32 %v1001, %v986
        %v1003 = vadd.f32 %v1002, %v987
        %v1004 = vadd.f32 %v1003, %v988
        %v1005 = vadd.f32 %v1004, %v989
        %v1006 = vadd.f32 %v1005, %v990
        %v1007 = vadd.f32 %v1006, %v991
        %v1008 = vadd.f32 %v1007, %v992
        %v1009 = vadd.f32 %v1008, %v993
        %v1010 = vadd.f32 %v1009, %v994
        %v1011 = vadd.f32 %v1010, %v995
        %v1012 = vadd.f32 %v1011, %v996
        %v1013 = vadd.f32 %v1012, %v997
        %v1014 = vadd.f32 %v1013, %v998
        %v1015 = vrot.slane %v1014, 4
        %v1016 = vadd.f32 %v1014, %v1015
        %v1017 = vrot.slane %v1016, 2
        %v1018 = vadd.f32 %v1016, %v1017
        %v1019 = vrot.slane %v1018, 1
        %v1020 = vadd.f32 %v1018, %v1019
        %v1021 = vadd.f32 %v999, %v1020
        %1022 = vst [vmem:[#allocation3] sm:$0x1] %v1021
        %v1023 = vld [vmem:[#allocation4] sm:$0x1]
        %v1024 = vmul.f32 %v983, %v983
        %v1025 = vmul.f32 %v984, %v984
        %v1026 = vmul.f32 %v985, %v985
        %v1027 = vmul.f32 %v986, %v986
        %v1028 = vmul.f32 %v987, %v987
        %v1029 = vmul.f32 %v988, %v988
        %v1030 = vmul.f32 %v989, %v989
        %v1031 = vmul.f32 %v990, %v990
        %v1032 = vmul.f32 %v991, %v991
        %v1033 = vmul.f32 %v992, %v992
        %v1034 = vmul.f32 %v993, %v993
        %v1035 = vmul.f32 %v994, %v994
        %v1036 = vmul.f32 %v995, %v995
        %v1037 = vmul.f32 %v996, %v996
        %v1038 = vmul.f32 %v997, %v997
        %v1039 = vmul.f32 %v998, %v998
        %v1040 = vadd.f32 %v1024, %v1025
        %v1041 = vadd.f32 %v1040, %v1026
        %v1042 = vadd.f32 %v1041, %v1027
        %v1043 = vadd.f32 %v1042, %v1028
        %v1044 = vadd.f32 %v1043, %v1029
        %v1045 = vadd.f32 %v1044, %v1030
        %v1046 = vadd.f32 %v1045, %v1031
        %v1047 = vadd.f32 %v1046, %v1032
        %v1048 = vadd.f32 %v1047, %v1033
        %v1049 = vadd.f32 %v1048, %v1034
        %v1050 = vadd.f32 %v1049, %v1035
        %v1051 = vadd.f32 %v1050, %v1036
        %v1052 = vadd.f32 %v1051, %v1037
        %v1053 = vadd.f32 %v1052, %v1038
        %v1054 = vadd.f32 %v1053, %v1039
        %v1055 = vrot.slane %v1054, 4
        %v1056 = vadd.f32 %v1054, %v1055
        %v1057 = vrot.slane %v1056, 2
        %v1058 = vadd.f32 %v1056, %v1057
        %v1059 = vrot.slane %v1058, 1
        %v1060 = vadd.f32 %v1058, %v1059
        %v1061 = vadd.f32 %v1023, %v1060
        %1062 = vst [vmem:[#allocation4] sm:$0x1] %v1061
        %s1063 = smul.u32 %s23, 128
        %v1064 = vpack.c.bf16 %v984, %v983
        %v1065 = vpack.c.bf16 %v986, %v985
        %v1066 = vpack.c.bf16 %v988, %v987
        %v1067 = vpack.c.bf16 %v990, %v989
        %v1068 = vpack.c.bf16 %v992, %v991
        %v1069 = vpack.c.bf16 %v994, %v993
        %v1070 = vpack.c.bf16 %v996, %v995
        %v1071 = vpack.c.bf16 %v998, %v997
        %v1080 = vunpack.c.l.b16 %v1064
        %v1081 = vunpack.c.h.b16 %v1064
        %v1082 = vunpack.c.l.b16 %v1065
        %v1083 = vunpack.c.h.b16 %v1065
        %v1084 = vunpack.c.l.b16 %v1066
        %v1085 = vunpack.c.h.b16 %v1066
        %v1086 = vunpack.c.l.b16 %v1067
        %v1087 = vunpack.c.h.b16 %v1067
        %v1088 = vunpack.c.l.b16 %v1068
        %v1089 = vunpack.c.h.b16 %v1068
        %v1090 = vunpack.c.l.b16 %v1069
        %v1091 = vunpack.c.h.b16 %v1069
        %v1092 = vunpack.c.l.b16 %v1070
        %v1093 = vunpack.c.h.b16 %v1070
        %v1094 = vunpack.c.l.b16 %v1071
        %v1095 = vunpack.c.h.b16 %v1071
        %v1096 = vpack.c.b16 %v1080, %v1080
        %v1097 = vpack.c.b16 %v1081, %v1081
        %v1098 = vpack.c.b16 %v1082, %v1082
        %v1099 = vpack.c.b16 %v1083, %v1083
        %v1100 = vpack.c.b16 %v1084, %v1084
        %v1101 = vpack.c.b16 %v1085, %v1085
        %v1102 = vpack.c.b16 %v1086, %v1086
        %v1103 = vpack.c.b16 %v1087, %v1087
        %v1104 = vpack.c.b16 %v1088, %v1088
        %v1105 = vpack.c.b16 %v1089, %v1089
        %v1106 = vpack.c.b16 %v1090, %v1090
        %v1107 = vpack.c.b16 %v1091, %v1091
        %v1108 = vpack.c.b16 %v1092, %v1092
        %v1109 = vpack.c.b16 %v1093, %v1093
        %v1110 = vpack.c.b16 %v1094, %v1094
        %v1111 = vpack.c.b16 %v1095, %v1095
        %s1128 = sshra.s32 %s1063, 3
        %s1129 = sand.u32 %s1063, 7
        %s1130 = smul.addr %s1128, 4
        %s1131 = scalar_lea.vmem [#allocation2], %s1130
        %1132 = vst [vmem:[%s1131] sm:$0xf] %v1096
        %1133 = vst [vmem:[%s1131 + $0x4] sm:$0xf] %v1097
        %1134 = vst [vmem:[%s1131 + $0x8] sm:$0xf] %v1098
        %1135 = vst [vmem:[%s1131 + $0xc] sm:$0xf] %v1099
        %1136 = vst [vmem:[%s1131 + $0x10] sm:$0xf] %v1100
        %1137 = vst [vmem:[%s1131 + $0x14] sm:$0xf] %v1101
        %1138 = vst [vmem:[%s1131 + $0x18] sm:$0xf] %v1102
        %1139 = vst [vmem:[%s1131 + $0x1c] sm:$0xf] %v1103
        %1140 = vst [vmem:[%s1131 + $0x20] sm:$0xf] %v1104
        %1141 = vst [vmem:[%s1131 + $0x24] sm:$0xf] %v1105
        %1142 = vst [vmem:[%s1131 + $0x28] sm:$0xf] %v1106
        %1143 = vst [vmem:[%s1131 + $0x2c] sm:$0xf] %v1107
        %1144 = vst [vmem:[%s1131 + $0x30] sm:$0xf] %v1108
        %1145 = vst [vmem:[%s1131 + $0x34] sm:$0xf] %v1109
        %1146 = vst [vmem:[%s1131 + $0x38] sm:$0xf] %v1110
        %1147 = vst [vmem:[%s1131 + $0x3c] sm:$0xf] %v1111
      $region44: #{conv_block.1} parent=39 // pred_fallthru
        _
      %p1148 = scmp.eq.s32.totalorder %s22, 1
      // Predicated region
      $region49: #{conv_block.1} parent=39 // pred_check
        %p1149 = pneg %p1148
      $region50: #{conv_block.1} parent=39 // pred_check_branch
        %1151 = sbr.rel (%p1149) target = $region52
      $region51: #{conv_block.1} parent=39 // pred_region
        %p1152 = scmp.eq.s32.totalorder %s23, 0
        // Predicated region
        $region53: #{conv_block.1} parent=51 // pred_check
          %p1153 = pneg %p1152
        $region54: #{conv_block.1} parent=51 // pred_check_branch
          %1155 = sbr.rel (%p1153) target = $region56
        $region55: #{conv_block.1} parent=51 // pred_region
          %v1156 = vld [vmem:[#allocation3] sm:$0x1]
          %v1157 = vrcp.pop 256.0
          %v1158 = vmul.f32 %v1156, %v1157
          %v1159 = vld [vmem:[#allocation4] sm:$0x1]
          %v1160 = vmul.f32 %v1159, %v1157
          %v1161 = vmul.f32 %v1158, %v1158
          %v1162 = vsub.f32 %v1160, %v1161
          %v1163 = vmax.f32 %v1162, 0.0
          %v1164 = vadd.f32 %v1163, 1e-05
          %v1165 = vrsqrt.pop %v1164
          %v1166 = vld [vmem:[%s3] sm:$0x1]
          %v1167 = vmul.f32 %v1166, %v1165
          %v1168 = vld [vmem:[%s4] sm:$0x1]
          %v1169 = vmul.f32 %v1158, %v1167
          %v1170 = vsub.f32 %v1168, %v1169
          %1171 = vst [vmem:[#allocation3] sm:$0x1] %v1167
          %1172 = vst [vmem:[#allocation4] sm:$0x1] %v1170
        $region56: #{conv_block.1} parent=51 // pred_fallthru
          _
        %s1173 = smul.u32 %s23, 128
        %s1174 = sshra.s32 %s1173, 3
        %s1175 = sand.u32 %s1173, 7
        %s1176 = smul.addr %s1174, 4
        %s1177 = scalar_lea.vmem [#allocation2], %s1176
        %v1178 = vld [vmem:[%s1177] sm:$0xf]
        %v1179 = vld [vmem:[%s1177 + $0x4] sm:$0xf]
        %v1180 = vld [vmem:[%s1177 + $0x8] sm:$0xf]
        %v1181 = vld [vmem:[%s1177 + $0xc] sm:$0xf]
        %v1182 = vld [vmem:[%s1177 + $0x10] sm:$0xf]
        %v1183 = vld [vmem:[%s1177 + $0x14] sm:$0xf]
        %v1184 = vld [vmem:[%s1177 + $0x18] sm:$0xf]
        %v1185 = vld [vmem:[%s1177 + $0x1c] sm:$0xf]
        %v1186 = vld [vmem:[%s1177 + $0x20] sm:$0xf]
        %v1187 = vld [vmem:[%s1177 + $0x24] sm:$0xf]
        %v1188 = vld [vmem:[%s1177 + $0x28] sm:$0xf]
        %v1189 = vld [vmem:[%s1177 + $0x2c] sm:$0xf]
        %v1190 = vld [vmem:[%s1177 + $0x30] sm:$0xf]
        %v1191 = vld [vmem:[%s1177 + $0x34] sm:$0xf]
        %v1192 = vld [vmem:[%s1177 + $0x38] sm:$0xf]
        %v1193 = vld [vmem:[%s1177 + $0x3c] sm:$0xf]
        %v1194 = vunpack.c.l.bf16 %v1178
        %v1195 = vunpack.c.l.bf16 %v1179
        %v1196 = vunpack.c.l.bf16 %v1180
        %v1197 = vunpack.c.l.bf16 %v1181
        %v1198 = vunpack.c.l.bf16 %v1182
        %v1199 = vunpack.c.l.bf16 %v1183
        %v1200 = vunpack.c.l.bf16 %v1184
        %v1201 = vunpack.c.l.bf16 %v1185
        %v1202 = vunpack.c.l.bf16 %v1186
        %v1203 = vunpack.c.l.bf16 %v1187
        %v1204 = vunpack.c.l.bf16 %v1188
        %v1205 = vunpack.c.l.bf16 %v1189
        %v1206 = vunpack.c.l.bf16 %v1190
        %v1207 = vunpack.c.l.bf16 %v1191
        %v1208 = vunpack.c.l.bf16 %v1192
        %v1209 = vunpack.c.l.bf16 %v1193
        %v1210 = vld [vmem:[#allocation3] sm:$0x1]
        %v1212 = vlaneseq
        %v1213 = vshrl.u32 %v1212, 7
        %v1214 = vsub.s32 0, %v1213
        %v1215 = vrot.slane %v1210, %v1214
        %v1217 = vmul.f32 %v1194, %v1215
        %v1218 = vmul.f32 %v1195, %v1215
        %v1219 = vmul.f32 %v1196, %v1215
        %v1220 = vmul.f32 %v1197, %v1215
        %v1221 = vmul.f32 %v1198, %v1215
        %v1222 = vmul.f32 %v1199, %v1215
        %v1223 = vmul.f32 %v1200, %v1215
        %v1224 = vmul.f32 %v1201, %v1215
        %v1225 = vmul.f32 %v1202, %v1215
        %v1226 = vmul.f32 %v1203, %v1215
        %v1227 = vmul.f32 %v1204, %v1215
        %v1228 = vmul.f32 %v1205, %v1215
        %v1229 = vmul.f32 %v1206, %v1215
        %v1230 = vmul.f32 %v1207, %v1215
        %v1231 = vmul.f32 %v1208, %v1215
        %v1232 = vmul.f32 %v1209, %v1215
        %v1233 = vld [vmem:[#allocation4] sm:$0x1]
        %v1235 = vlaneseq
        %v1236 = vshrl.u32 %v1235, 7
        %v1237 = vsub.s32 0, %v1236
        %v1238 = vrot.slane %v1233, %v1237
        %v1240 = vadd.f32 %v1217, %v1238
        %v1241 = vadd.f32 %v1218, %v1238
        %v1242 = vadd.f32 %v1219, %v1238
        %v1243 = vadd.f32 %v1220, %v1238
        %v1244 = vadd.f32 %v1221, %v1238
        %v1245 = vadd.f32 %v1222, %v1238
        %v1246 = vadd.f32 %v1223, %v1238
        %v1247 = vadd.f32 %v1224, %v1238
        %v1248 = vadd.f32 %v1225, %v1238
        %v1249 = vadd.f32 %v1226, %v1238
        %v1250 = vadd.f32 %v1227, %v1238
        %v1251 = vadd.f32 %v1228, %v1238
        %v1252 = vadd.f32 %v1229, %v1238
        %v1253 = vadd.f32 %v1230, %v1238
        %v1254 = vadd.f32 %v1231, %v1238
        %v1255 = vadd.f32 %v1232, %v1238
        %v1256 = vmax.f32 %v1240, 0.0
        %v1257 = vmax.f32 %v1241, 0.0
        %v1258 = vmax.f32 %v1242, 0.0
        %v1259 = vmax.f32 %v1243, 0.0
        %v1260 = vmax.f32 %v1244, 0.0
        %v1261 = vmax.f32 %v1245, 0.0
        %v1262 = vmax.f32 %v1246, 0.0
        %v1263 = vmax.f32 %v1247, 0.0
        %v1264 = vmax.f32 %v1248, 0.0
        %v1265 = vmax.f32 %v1249, 0.0
        %v1266 = vmax.f32 %v1250, 0.0
        %v1267 = vmax.f32 %v1251, 0.0
        %v1268 = vmax.f32 %v1252, 0.0
        %v1269 = vmax.f32 %v1253, 0.0
        %v1270 = vmax.f32 %v1254, 0.0
        %v1271 = vmax.f32 %v1255, 0.0
        %1272 = vst [vmem:[%s257] sm:$0xff] %v1256
        %1273 = vst [vmem:[%s257 + $0x8] sm:$0xff] %v1257
        %1274 = vst [vmem:[%s257 + $0x10] sm:$0xff] %v1258
        %1275 = vst [vmem:[%s257 + $0x18] sm:$0xff] %v1259
        %1276 = vst [vmem:[%s257 + $0x20] sm:$0xff] %v1260
        %1277 = vst [vmem:[%s257 + $0x28] sm:$0xff] %v1261
        %1278 = vst [vmem:[%s257 + $0x30] sm:$0xff] %v1262
        %1279 = vst [vmem:[%s257 + $0x38] sm:$0xff] %v1263
        %1280 = vst [vmem:[%s257 + $0x40] sm:$0xff] %v1264
        %1281 = vst [vmem:[%s257 + $0x48] sm:$0xff] %v1265
        %1282 = vst [vmem:[%s257 + $0x50] sm:$0xff] %v1266
        %1283 = vst [vmem:[%s257 + $0x58] sm:$0xff] %v1267
        %1284 = vst [vmem:[%s257 + $0x60] sm:$0xff] %v1268
        %1285 = vst [vmem:[%s257 + $0x68] sm:$0xff] %v1269
        %1286 = vst [vmem:[%s257 + $0x70] sm:$0xff] %v1270
        %1287 = vst [vmem:[%s257 + $0x78] sm:$0xff] %v1271
      $region52: #{conv_block.1} parent=39 // pred_fallthru
        _
      %s1288 = smul.u32 %s22, %s23
      %s1289 = smul.u32 16, %s1288
      %p1290 = scmp.lt.s32.totalorder %s21, 1
      %s1291 = scalar_select %p1290, %s21, 1
      %p1292 = scmp.lt.s32.totalorder %s1289, 31
      %s1293 = scalar_select %p1292, %s1289, 31
      %s1294 = smul.addr %s1291, 32
      %s1295 = sadd.s32 %s1293, %s1294
      %s1296 = smul.addr %s1295, 8
      %s1297 = scalar_lea.vmem %s5, %s1296
      // Predicated region
      $region57: #{conv_block.1} parent=39 // pred_check
        %p1298 = pneg %p167
      $region58: #{conv_block.1} parent=39 // pred_check_branch
        %1300 = sbr.rel (%p1298) target = $region60
      $region59: #{conv_block.1} parent=39 // pred_region
        %s1301 = smul.u32 %s22, %s23
        %s1302 = smul.u32 16, %s1301
      $region60: #{conv_block.1} parent=39 // pred_fallthru
        _
    $region40: #{conv_block.1} parent=5 // pred_fallthru
      _
    %p1303 = scmp.le.s32.totalorder 2, %s11
    // Predicated region
    $region61: #{conv_block.1} parent=5 // pred_check
      %p1304 = pneg %p1303
    $region62: #{conv_block.1} parent=5 // pred_check_branch
      %1306 = sbr.rel (%p1304) target = $region64
    $region63: #{conv_block.1} parent=5 // pred_region
      %s1307 = ssub.s32 %s11, 2
      // Predicated region
      $region65: #{conv_block.1} parent=63 // pred_check
        %p1308 = pneg %p173
      $region66: #{conv_block.1} parent=63 // pred_check_branch
        %1310 = sbr.rel (%p1308) target = $region68
      $region67: #{conv_block.1} parent=63 // pred_region
        %s1311 = smul.u32 %s25, %s26
        %s1312 = smul.u32 16, %s1311
        %p1313 = scmp.lt.s32.totalorder %s24, 1
        %s1314 = scalar_select %p1313, %s24, 1
        %p1315 = scmp.lt.s32.totalorder %s1312, 31
        %s1316 = scalar_select %p1315, %s1312, 31
        %s1317 = smul.addr %s1314, 32
        %s1318 = sadd.s32 %s1316, %s1317
        %s1319 = smul.addr %s1318, 8
        %s1320 = scalar_lea.vmem %s5, %s1319
      $region68: #{conv_block.1} parent=63 // pred_fallthru
        _
    $region64: #{conv_block.1} parent=5 // pred_fallthru
      _
  $region6: #{conv_block.1} parent=0 // loop_footer
    %s15 = sadd.s32 1, %s11
  $region7: #{conv_block.1} parent=0 // loop_footer_branch
    %10 = sbr.rel target = $region3
  $region8: #{conv_block.1} parent=0 // loop_exit
    _

</llo_original>
